<compile_context>
chip_gen: v5e
topology: v5e:2x2
jax: 0.10.0
libtpu: 0.0.40
codegen_flags: <defaults>
</compile_context>

<pallas_src>
import math

import jax
import jax.numpy as jnp
from jax.experimental import pallas as pl
from jax.experimental.pallas import tpu as pltpu


def ffn_kernel(x_ref, w1_ref, b1_ref, w2_ref, b2_ref, o_ref):
    # x_ref: (tm, D) f32, w1_ref: (D, th) bf16, b1_ref: (1, th) f32,
    # w2_ref: (th, D) bf16, b2_ref: (1, D) f32, o_ref: (tm, D) f32 (resident acc).
    j = pl.program_id(1)

    @pl.when(j == 0)
    def _():
        # Initialise the resident output tile with the second bias (saves a
        # separate final bias-add pass and any extra accumulator scratch).
        o_ref[...] = jnp.broadcast_to(b2_ref[...], o_ref.shape).astype(o_ref.dtype)

    # First matmul: cast x to bf16 in-kernel (VPU work hidden under MXU time),
    # accumulate in f32 on the MXU; bias + ReLU in f32.
    x_bf = x_ref[...].astype(jnp.bfloat16)
    h = jnp.dot(x_bf, w1_ref[...], preferred_element_type=jnp.float32)
    h = jnp.maximum(h + b1_ref[...], 0.0)
    # TODO(synk): training-mode dropout (p=0.1) would mask `h` here via
    # pltpu.prng_seed + pltpu.stateful_bernoulli; eval-mode dropout == identity.

    # Second matmul: accumulate this hidden chunk's contribution into o_ref.
    o_ref[...] += jnp.dot(h.astype(jnp.bfloat16), w2_ref[...],
                          preferred_element_type=jnp.float32)


def _round_up(x, m):
    return ((x + m - 1) // m) * m


def _largest_mult_divisor(n, multiple, cap):
    """Largest divisor of n that is a multiple of `multiple` and <= cap (or None)."""
    best = None
    c = multiple
    limit = min(n, cap)
    while c <= limit:
        if n % c == 0:
            best = c
        c += multiple
    return best


def _vmem_capacity_bytes():
    try:
        return int(pltpu.get_tpu_info().vmem_capacity_bytes)
    except Exception:
        return 64 << 20  # conservative (v7x-sized) fallback


def _auto_config(M, dim, hidden, tm, th, vmem_cap):
    small_vmem = vmem_cap <= (64 << 20)  # v7x-like: 64 MiB per TC, 2 TCs

    # Hidden-chunk width: largest multiple-of-128 divisor of hidden, prefer <= 512.
    if th is None:
        th = _largest_mult_divisor(hidden, 128, 512)
        if th is None:
            th = hidden  # tiny / odd hidden: single chunk (fits VMEM trivially)
    else:
        th = min(th, hidden)
        if hidden % th != 0:
            th = _largest_mult_divisor(hidden, 128, th) or hidden

    if tm is None:
        # Budget the row tile from the real VMEM capacity (leave Mosaic headroom).
        budget = min(vmem_cap, 128 << 20) - (8 << 20)
        fixed = 2 * (dim * th * 2) * 2 + 2 * (th + dim) * 4  # dbl-buffered W1+W2 + biases
        per_row = 18 * dim + 6 * th  # x f32 dbl + bf16 copy + out f32 dbl + h f32/bf16
        tm = max((budget - fixed) // per_row, 8)
        tm = min(tm, 384 if small_vmem else 1024)
        tm = max((tm // 8) * 8, 8)
        # On 2-TC (small-VMEM) parts guarantee >= 2 row tiles so both cores get work.
        if small_vmem and M > 8:
            tm = min(tm, _round_up(pl.cdiv(M, 2), 8))

    tm = min(tm, _round_up(M, 8))
    tm = max((tm // 8) * 8, 8)
    return tm, th


def _vmem_limit_bytes(tm, dim, th, vmem_cap):
    bf16, f32 = 2, 4
    need = (
        2 * tm * dim * f32        # x tile (f32, double-buffered)
        + tm * dim * bf16         # in-kernel bf16 copy of x
        + 2 * dim * th * bf16     # w1 chunk (double-buffered)
        + 2 * th * f32            # b1 chunk
        + 2 * th * dim * bf16     # w2 chunk (double-buffered)
        + 2 * dim * f32           # b2
        + 2 * tm * dim * f32      # output tile (f32 accumulator, double-buffered)
        + tm * th * (f32 + bf16)  # live hidden intermediate (+ its bf16 cast)
    )
    cap = min(vmem_cap, 128 << 20) - (4 << 20)  # headroom for Mosaic internal scratch
    return int(max(min(need + (4 << 20), cap), 32 << 20))


def feed_forward(x, w1, b1, w2, b2, *, tm=None, th=None):
    """x: (batch, seq, dim). Returns same shape (eval-mode FeedForward)."""
    batch, seq, dim = x.shape
    hidden = w1.shape[1]
    M = batch * seq

    vmem_cap = _vmem_capacity_bytes()
    tm, th = _auto_config(M, dim, hidden, tm, th, vmem_cap)
    h_tiles = hidden // th

    # Ragged M: pad rows up to a multiple of tm (padded rows are discarded).
    m_pad = pl.cdiv(M, tm) * tm
    x2d = x.reshape(M, dim)
    if x2d.dtype != jnp.float32:
        x2d = x2d.astype(jnp.float32)
    if m_pad != M:
        x2d = jnp.pad(x2d, ((0, m_pad - M), (0, 0)))
    m_tiles = m_pad // tm

    # Weights as (in, out) bf16 MXU operands; prefer callers storing bf16 already.
    w1_bf = w1 if w1.dtype == jnp.bfloat16 else w1.astype(jnp.bfloat16)
    w2_bf = w2 if w2.dtype == jnp.bfloat16 else w2.astype(jnp.bfloat16)
    b1_2d = b1.reshape(1, hidden).astype(jnp.float32)
    b2_2d = b2.reshape(1, dim).astype(jnp.float32)

    # Advisory cost: two matmuls; weights are re-streamed once per row tile.
    cost = pl.CostEstimate(
        flops=4 * m_pad * dim * hidden,
        transcendentals=0,
        bytes_accessed=(m_tiles * (2 * dim * hidden * 2 + (hidden + dim) * 4)
                        + m_pad * dim * 4 * 2),
    )

    out2d = pl.pallas_call(
        ffn_kernel,
        out_shape=jax.ShapeDtypeStruct((m_pad, dim), jnp.float32),
        grid_spec=pltpu.PrefetchScalarGridSpec(
            num_scalar_prefetch=0,
            grid=(m_tiles, h_tiles),  # rows parallel, hidden reduction last
            in_specs=[
                pl.BlockSpec((tm, dim), lambda i, j: (i, 0)),   # x row tile
                pl.BlockSpec((dim, th), lambda i, j: (0, j)),   # w1 hidden chunk
                pl.BlockSpec((1, th), lambda i, j: (0, j)),     # b1 hidden chunk
                pl.BlockSpec((th, dim), lambda i, j: (j, 0)),   # w2 hidden chunk
                pl.BlockSpec((1, dim), lambda i, j: (0, 0)),    # b2
            ],
            out_specs=pl.BlockSpec((tm, dim), lambda i, j: (i, 0)),
        ),
        compiler_params=pltpu.CompilerParams(
            dimension_semantics=("parallel", "arbitrary"),
            vmem_limit_bytes=_vmem_limit_bytes(tm, dim, th, vmem_cap),
        ),
        cost_estimate=cost,
    )(x2d, w1_bf, b1_2d, w2_bf, b2_2d)

    out2d = out2d[:M].reshape(batch, seq, dim)
    return out2d.astype(x.dtype)


def init_params(key, dim):
    """Deterministic init matching nn.Linear's U(-1/sqrt(fan_in), 1/sqrt(fan_in))."""
    hidden = dim * 4
    k1, k2, k3, k4 = jax.random.split(key, 4)
    bound1 = 1.0 / math.sqrt(dim)
    bound2 = 1.0 / math.sqrt(hidden)
    # stored as (in, out): PyTorch's weight is (out, in), applied as x @ W.T
    w1 = jax.random.uniform(k1, (dim, hidden), jnp.float32, -bound1, bound1)
    b1 = jax.random.uniform(k2, (hidden,), jnp.float32, -bound1, bound1)
    w2 = jax.random.uniform(k3, (hidden, dim), jnp.float32, -bound2, bound2)
    b2 = jax.random.uniform(k4, (dim,), jnp.float32, -bound2, bound2)
    return w1, b1, w2, b2


if __name__ == "__main__":
    key = jax.random.PRNGKey(0)
    k_x, k_p = jax.random.split(key)

    # dim=128 keeps the output lane-dense; M=400 exercises the ragged-M padding.
    batch, seq, dim = 4, 100, 128            # hidden = 512, M = 400
    x = jax.random.normal(k_x, (batch, seq, dim), jnp.float32)
    w1, b1, w2, b2 = init_params(k_p, dim)

    # Reference with matched precision (bf16 MXU operands, f32 accumulation;
    # dropout eval == identity).
    x2d = x.reshape(-1, dim).astype(jnp.bfloat16)
    h = jnp.dot(x2d, w1.astype(jnp.bfloat16), preferred_element_type=jnp.float32) + b1
    h = jnp.maximum(h, 0.0).astype(jnp.bfloat16)
    ref = jnp.dot(h, w2.astype(jnp.bfloat16), preferred_element_type=jnp.float32) + b2
    ref = ref.reshape(batch, seq, dim)

    # 1) Auto-configured tiles (generation-aware tm / th).
    out_auto = jax.block_until_ready(feed_forward(x, w1, b1, w2, b2))
    assert out_auto.shape == x.shape
    assert jnp.allclose(out_auto, ref, atol=1e-2, rtol=1e-2), "auto-config mismatch"

    # 2) Small forced tiles to exercise the hidden-chunk accumulation path and
    #    multiple ragged row tiles (test-only config; production uses auto).
    out_small = jax.block_until_ready(feed_forward(x, w1, b1, w2, b2, tm=64, th=128))
    assert out_small.shape == x.shape
    assert jnp.allclose(out_small, ref, atol=1e-2, rtol=1e-2), "small-tile mismatch"

    print("KERNEL_OK")
</pallas_src>

<mosaic_0001>
module attributes {stable_mosaic.version = 11 : i64} {
  func.func @ffn_kernel(%arg0: i32, %arg1: i32, %arg2: memref<200x128xf32, #tpu.memory_space<vmem>>, %arg3: memref<128x512xbf16, #tpu.memory_space<vmem>>, %arg4: memref<1x512xf32, #tpu.memory_space<vmem>>, %arg5: memref<512x128xbf16, #tpu.memory_space<vmem>>, %arg6: memref<1x128xf32, #tpu.memory_space<vmem>>, %arg7: memref<200x128xf32, #tpu.memory_space<vmem>>) attributes {dimension_semantics = [#tpu.dimension_semantics<parallel>, #tpu.dimension_semantics<arbitrary>], iteration_bounds = array<i64: 2, 1>, scalar_prefetch = 0 : i64, scratch_operands = 0 : i64, tpu.core_type = #tpu.core_type<tc>, window_params = [{transform_indices = @transform_0, window_bounds = array<i64: 200, 128>}, {transform_indices = @transform_1, window_bounds = array<i64: 128, 512>}, {transform_indices = @transform_2, window_bounds = array<i64: 1, 512>}, {transform_indices = @transform_3, window_bounds = array<i64: 512, 128>}, {pipeline_mode = #tpu.pipeline_mode<synchronous>, transform_indices = @transform_4, window_bounds = array<i64: 1, 128>}, {transform_indices = @transform_5, window_bounds = array<i64: 200, 128>}]} {
    %c0_i32 = arith.constant 0 : i32
    %0 = arith.cmpi eq, %arg1, %c0_i32 : i32
    %1 = arith.extui %0 : i1 to i32
    %c0_i32_0 = arith.constant 0 : i32
    %2 = arith.cmpi ne, %1, %c0_i32_0 : i32
    scf.if %2 {
      %c0_14 = arith.constant 0 : index
      %c0_15 = arith.constant 0 : index
      %18 = vector.load %arg6[%c0_14, %c0_15] : memref<1x128xf32, #tpu.memory_space<vmem>>, vector<1x128xf32>
      %19 = vector.shape_cast %18 : vector<1x128xf32> to vector<1x128xf32>
      %20 = vector.broadcast %19 : vector<1x128xf32> to vector<200x128xf32>
      %c0_16 = arith.constant 0 : index
      %c0_17 = arith.constant 0 : index
      %21 = vector.load %arg7[%c0_16, %c0_17] : memref<200x128xf32, #tpu.memory_space<vmem>>, vector<200x128xf32>
      tpu.vector_store %arg7[%c0_16, %c0_17], %20 {strides = array<i32>} : memref<200x128xf32, #tpu.memory_space<vmem>>, vector<200x128xf32>,
    } else {
    }
    %c0 = arith.constant 0 : index
    %c0_1 = arith.constant 0 : index
    %3 = vector.load %arg2[%c0, %c0_1] : memref<200x128xf32, #tpu.memory_space<vmem>>, vector<200x128xf32>
    %4 = arith.truncf %3 : vector<200x128xf32> to vector<200x128xbf16>
    %c0_2 = arith.constant 0 : index
    %c0_3 = arith.constant 0 : index
    %5 = vector.load %arg3[%c0_2, %c0_3] : memref<128x512xbf16, #tpu.memory_space<vmem>>, vector<128x512xbf16>
    %cst = arith.constant dense<0.000000e+00> : vector<200x512xf32>
    %6 = tpu.matmul %4, %5, %cst {dimension_numbers = #tpu.dot_dimension_numbers<[1], [0], [0], [1], [0, 0, 1, 1], [], []>} : vector<200x128xbf16>, vector<128x512xbf16>, vector<200x512xf32> -> vector<200x512xf32>
    %c0_4 = arith.constant 0 : index
    %c0_5 = arith.constant 0 : index
    %7 = vector.load %arg4[%c0_4, %c0_5] : memref<1x512xf32, #tpu.memory_space<vmem>>, vector<1x512xf32>
    %8 = vector.broadcast %7 : vector<1x512xf32> to vector<200x512xf32>
    %9 = arith.addf %6, %8 : vector<200x512xf32>
    %cst_6 = arith.constant 0.000000e+00 : f32
    %10 = vector.broadcast %cst_6 : f32 to vector<200x512xf32>
    %11 = arith.maximumf %9, %10 : vector<200x512xf32>
    %c0_7 = arith.constant 0 : index
    %c0_8 = arith.constant 0 : index
    %12 = vector.load %arg7[%c0_7, %c0_8] : memref<200x128xf32, #tpu.memory_space<vmem>>, vector<200x128xf32>
    %13 = arith.truncf %11 : vector<200x512xf32> to vector<200x512xbf16>
    %c0_9 = arith.constant 0 : index
    %c0_10 = arith.constant 0 : index
    %14 = vector.load %arg5[%c0_9, %c0_10] : memref<512x128xbf16, #tpu.memory_space<vmem>>, vector<512x128xbf16>
    %cst_11 = arith.constant dense<0.000000e+00> : vector<200x128xf32>
    %15 = tpu.matmul %13, %14, %cst_11 {dimension_numbers = #tpu.dot_dimension_numbers<[1], [0], [0], [1], [0, 0, 1, 1], [], []>} : vector<200x512xbf16>, vector<512x128xbf16>, vector<200x128xf32> -> vector<200x128xf32>
    %16 = arith.addf %12, %15 : vector<200x128xf32>
    %c0_12 = arith.constant 0 : index
    %c0_13 = arith.constant 0 : index
    %17 = vector.load %arg7[%c0_12, %c0_13] : memref<200x128xf32, #tpu.memory_space<vmem>>, vector<200x128xf32>
    tpu.vector_store %arg7[%c0_12, %c0_13], %16 {strides = array<i32>} : memref<200x128xf32, #tpu.memory_space<vmem>>, vector<200x128xf32>,
    return
  }
  func.func @transform_0(%arg0: i32, %arg1: i32) -> (i32, i32) {
    %c0_i32 = arith.constant 0 : i32
    %c0_i32_0 = arith.constant 0 : i32
    return %arg0, %c0_i32 : i32, i32
  }
  func.func @transform_1(%arg0: i32, %arg1: i32) -> (i32, i32) {
    %c0_i32 = arith.constant 0 : i32
    %c0_i32_0 = arith.constant 0 : i32
    return %c0_i32, %arg1 : i32, i32
  }
  func.func @transform_2(%arg0: i32, %arg1: i32) -> (i32, i32) {
    %c0_i32 = arith.constant 0 : i32
    %c0_i32_0 = arith.constant 0 : i32
    return %c0_i32, %arg1 : i32, i32
  }
  func.func @transform_3(%arg0: i32, %arg1: i32) -> (i32, i32) {
    %c0_i32 = arith.constant 0 : i32
    %c0_i32_0 = arith.constant 0 : i32
    return %arg1, %c0_i32 : i32, i32
  }
  func.func @transform_4(%arg0: i32, %arg1: i32) -> (i32, i32) {
    %c0_i32 = arith.constant 0 : i32
    %c0_i32_0 = arith.constant 0 : i32
    %c0_i32_1 = arith.constant 0 : i32
    return %c0_i32, %c0_i32_0 : i32, i32
  }
  func.func @transform_5(%arg0: i32, %arg1: i32) -> (i32, i32) {
    %c0_i32 = arith.constant 0 : i32
    %c0_i32_0 = arith.constant 0 : i32
    return %arg0, %c0_i32 : i32, i32
  }
}

</mosaic_0001>

<llo_original>
// kernel: tpu_custom_call.1
$region0: #{tpu_custom_call.1}
  #allocation0 [shape = 'u32[]', space=smem, size = 0x4, offset = 0x4, fixed_abs, tag = 'smem constant byte address 0x4 - core index']
  #allocation1 [shape = 'u32[72,128]{1,0:T(1,128)}', space=vmem, size = 0x9000, scoped, tag = 'internal scratch']
  %s0 = inlined_call_operand.hbm [shape: f32[400,128], index: 0, kind: input, shape index: {}]
  %s1 = inlined_call_operand.hbm [shape: bf16[128,512], index: 1, kind: input, shape index: {}]
  %s2 = inlined_call_operand.hbm [shape: f32[1,512], index: 2, kind: input, shape index: {}]
  %s3 = inlined_call_operand.hbm [shape: bf16[512,128], index: 3, kind: input, shape index: {}]
  %s4 = inlined_call_operand.vmem [shape: f32[1,128], index: 4, kind: input, shape index: {}]
  %s5 = inlined_call_operand.hbm [shape: f32[400,128], index: 5, kind: output, shape index: {}]
  %s6 = sld [smem:[#allocation0]]
  $region73: #{tpu_custom_call.1} parent=0
    _
  %s8 = ssub.s32 1, %s6
  %s9 = scalar_select 0, %s8, %s6
  $region1: #{tpu_custom_call.1} parent=0
    #allocation2 [shape = 'u8[204800]{0}', space=vmem, size = 0x32000, scoped, tag = 'input window, operand 0']
    #allocation3 [shape = 's32[2]{0}', space=sflag, size = 0x8, scoped, tag = 'scoped memory for tpu_custom_call.1']
    #allocation4 [shape = 's32[2]{0}', space=sflag, size = 0x8, scoped, tag = 'scoped memory for tpu_custom_call.1']
    #allocation5 [shape = 'u8[131072]{0}', space=vmem, size = 0x20000, scoped, tag = 'input window, operand 1, single buffered']
    #allocation6 [shape = 's32[1]{0}', space=sflag, size = 0x4, scoped, tag = 'scoped memory for tpu_custom_call.1']
    #allocation7 [shape = 'u8[2048]{0}', space=vmem, size = 0x800, scoped, tag = 'input window, operand 2, single buffered']
    #allocation8 [shape = 'u8[131072]{0}', space=vmem, size = 0x20000, scoped, tag = 'input window, operand 3, single buffered']
    #allocation9 [shape = 's32[1]{0}', space=sflag, size = 0x4, scoped, tag = 'scoped memory for tpu_custom_call.1']
    #allocation10 [shape = 'u8[204800]{0}', space=vmem, size = 0x32000, scoped, tag = 'output window, operand 0']
    %10 = vsyncpa [#allocation3], 0
    %s11 = scalar_lea.sflag [#allocation3], 1
    %12 = vsyncpa %s11, 0
    %13 = vsyncpa [#allocation6], 0
    %14 = vsyncpa [#allocation9], 0
    %15 = vsyncpa [#allocation4], 0
    %s16 = scalar_lea.sflag [#allocation4], 1
    %17 = vsyncpa %s16, 0
    loop: start=0, step=1, limit=4
    $region2: #{tpu_custom_call.1} parent=1 // loop_pre_header
      _
    $region3: #{tpu_custom_call.1} parent=1 // loop_header
      %s19 = sphi 0, %s23
      %p20 = scmp.ge.s32.totalorder %s19, 4
      %s26 = sphi 0, %s38
      %s27 = sphi 0, %s34
      %s28 = sphi 0, %s26
      %s29 = sphi 0, %s27
      %s30 = sphi 0, %s28
      %s31 = sphi 0, %s29
      %s41 = sphi 0, %s43
      %s44 = sphi 0, %s41
      %s45 = sphi 0, %s44
      %s61 = sphi 0, %s45
      %s67 = sphi 0, %s69
      %s70 = sphi 0, %s67
      %s71 = sphi 0, %s70
      %s87 = sphi 0, %s71
      %s93 = sphi 0, %s95
      %s96 = sphi 0, %s93
      %s97 = sphi 0, %s96
      %s113 = sphi 0, %s97
      %s119 = sphi 0, %s121
      %s122 = sphi 0, %s119
      %s123 = sphi 0, %s122
      %s139 = sphi 0, %s123
      %s143 = sphi 0, %s143
      %s145 = sphi 0, %s143
      %s146 = sphi 0, %s145
      %s160 = sphi 0, %s146
      %s166 = sphi 0, %s168
      %s169 = sphi 0, %s166
      %s170 = sphi 0, %s169
      %s186 = sphi 0, %s170
    $region4: #{tpu_custom_call.1} parent=1 // loop_header_branch
      %22 = sbr.rel (%p20) target = $region8
    $region5: #{tpu_custom_call.1} parent=1 // loop_body
      %s24 = ssub.s32 %s19, 1
      %s25 = ssub.s32 %s19, 2
      %s32 = sadd.s32 1, %s27
      %p33 = scmp.ge.s32.totalorder %s32, 1
      %s34 = scalar_select %p33, 0, %s32
      %s35 = sadd.s32 1, %s26
      %s36 = scalar_select %p33, %s35, %s26
      %p37 = scmp.ge.s32.totalorder %s36, 2
      %s38 = scalar_select %p37, 0, %s36
      %s39 = ssub.s32 %s26, %s38
      %p40 = scmp.eq.s32.totalorder %s39, 0
      %s42 = sadd.s32 %s41, 1
      %s43 = scalar_select %p40, %s41, %s42
      %p46 = pneg %p40
      %p47 = scmp.eq.s32.totalorder %s19, 1
      %p48 = por %p46, %p47
      %p49 = scmp.ne.s32.totalorder %s41, %s44
      %p50 = scmp.eq.s32.totalorder %s19, 0
      %p51 = por %p49, %p50
      %p52 = scmp.ne.s32.totalorder %s41, %s44
      %p53 = scmp.eq.s32.totalorder %s24, 1
      %p54 = por %p52, %p53
      %p55 = scmp.ne.s32.totalorder %s44, %s45
      %p56 = scmp.eq.s32.totalorder %s24, 0
      %p57 = por %p55, %p56
      %p58 = scmp.ne.s32.totalorder %s44, %s45
      %p59 = scmp.eq.s32.totalorder %s25, 1
      %p60 = por %p58, %p59
      %p62 = scmp.ne.s32.totalorder %s45, %s61
      %p63 = scmp.eq.s32.totalorder %s25, 0
      %p64 = por %p62, %p63
      %s65 = ssub.s32 %s27, %s34
      %p66 = scmp.eq.s32.totalorder %s65, 0
      %s68 = sadd.s32 %s67, 1
      %s69 = scalar_select %p66, %s67, %s68
      %p72 = pneg %p66
      %p73 = scmp.eq.s32.totalorder %s19, 1
      %p74 = por %p72, %p73
      %p75 = scmp.ne.s32.totalorder %s67, %s70
      %p76 = scmp.eq.s32.totalorder %s19, 0
      %p77 = por %p75, %p76
      %p78 = scmp.ne.s32.totalorder %s67, %s70
      %p79 = scmp.eq.s32.totalorder %s24, 1
      %p80 = por %p78, %p79
      %p81 = scmp.ne.s32.totalorder %s70, %s71
      %p82 = scmp.eq.s32.totalorder %s24, 0
      %p83 = por %p81, %p82
      %p84 = scmp.ne.s32.totalorder %s70, %s71
      %p85 = scmp.eq.s32.totalorder %s25, 1
      %p86 = por %p84, %p85
      %p88 = scmp.ne.s32.totalorder %s71, %s87
      %p89 = scmp.eq.s32.totalorder %s25, 0
      %p90 = por %p88, %p89
      %s91 = ssub.s32 %s27, %s34
      %p92 = scmp.eq.s32.totalorder %s91, 0
      %s94 = sadd.s32 %s93, 1
      %s95 = scalar_select %p92, %s93, %s94
      %p98 = pneg %p92
      %p99 = scmp.eq.s32.totalorder %s19, 1
      %p100 = por %p98, %p99
      %p101 = scmp.ne.s32.totalorder %s93, %s96
      %p102 = scmp.eq.s32.totalorder %s19, 0
      %p103 = por %p101, %p102
      %p104 = scmp.ne.s32.totalorder %s93, %s96
      %p105 = scmp.eq.s32.totalorder %s24, 1
      %p106 = por %p104, %p105
      %p107 = scmp.ne.s32.totalorder %s96, %s97
      %p108 = scmp.eq.s32.totalorder %s24, 0
      %p109 = por %p107, %p108
      %p110 = scmp.ne.s32.totalorder %s96, %s97
      %p111 = scmp.eq.s32.totalorder %s25, 1
      %p112 = por %p110, %p111
      %p114 = scmp.ne.s32.totalorder %s97, %s113
      %p115 = scmp.eq.s32.totalorder %s25, 0
      %p116 = por %p114, %p115
      %s117 = ssub.s32 %s27, %s34
      %p118 = scmp.eq.s32.totalorder %s117, 0
      %s120 = sadd.s32 %s119, 1
      %s121 = scalar_select %p118, %s119, %s120
      %p124 = pneg %p118
      %p125 = scmp.eq.s32.totalorder %s19, 1
      %p126 = por %p124, %p125
      %p127 = scmp.ne.s32.totalorder %s119, %s122
      %p128 = scmp.eq.s32.totalorder %s19, 0
      %p129 = por %p127, %p128
      %p130 = scmp.ne.s32.totalorder %s119, %s122
      %p131 = scmp.eq.s32.totalorder %s24, 1
      %p132 = por %p130, %p131
      %p133 = scmp.ne.s32.totalorder %s122, %s123
      %p134 = scmp.eq.s32.totalorder %s24, 0
      %p135 = por %p133, %p134
      %p136 = scmp.ne.s32.totalorder %s122, %s123
      %p137 = scmp.eq.s32.totalorder %s25, 1
      %p138 = por %p136, %p137
      %p140 = scmp.ne.s32.totalorder %s123, %s139
      %p141 = scmp.eq.s32.totalorder %s25, 0
      %p142 = por %p140, %p141
      %s144 = sadd.s32 %s143, 1
      %p147 = scmp.eq.s32.totalorder %s19, 1
      %p148 = scmp.ne.s32.totalorder %s143, %s145
      %p149 = scmp.eq.s32.totalorder %s19, 0
      %p150 = por %p148, %p149
      %p151 = scmp.ne.s32.totalorder %s143, %s145
      %p152 = scmp.eq.s32.totalorder %s24, 1
      %p153 = por %p151, %p152
      %p154 = scmp.ne.s32.totalorder %s145, %s146
      %p155 = scmp.eq.s32.totalorder %s24, 0
      %p156 = por %p154, %p155
      %p157 = scmp.ne.s32.totalorder %s145, %s146
      %p158 = scmp.eq.s32.totalorder %s25, 1
      %p159 = por %p157, %p158
      %p161 = scmp.ne.s32.totalorder %s146, %s160
      %p162 = scmp.eq.s32.totalorder %s25, 0
      %p163 = por %p161, %p162
      %s164 = ssub.s32 %s26, %s38
      %p165 = scmp.eq.s32.totalorder %s164, 0
      %s167 = sadd.s32 %s166, 1
      %s168 = scalar_select %p165, %s166, %s167
      %p171 = pneg %p165
      %p172 = scmp.eq.s32.totalorder %s19, 1
      %p173 = por %p171, %p172
      %p174 = scmp.ne.s32.totalorder %s166, %s169
      %p175 = scmp.eq.s32.totalorder %s19, 0
      %p176 = por %p174, %p175
      %p177 = scmp.ne.s32.totalorder %s166, %s169
      %p178 = scmp.eq.s32.totalorder %s24, 1
      %p179 = por %p177, %p178
      %p180 = scmp.ne.s32.totalorder %s169, %s170
      %p181 = scmp.eq.s32.totalorder %s24, 0
      %p182 = por %p180, %p181
      %p183 = scmp.ne.s32.totalorder %s169, %s170
      %p184 = scmp.eq.s32.totalorder %s25, 1
      %p185 = por %p183, %p184
      %p187 = scmp.ne.s32.totalorder %s170, %s186
      %p188 = scmp.eq.s32.totalorder %s25, 0
      %p189 = por %p187, %p188
      %p190 = scmp.le.s32.totalorder 1, %s19
      %p191 = scmp.lt.s32.totalorder %s19, 3
      %p192 = pnand %p190, %p191
      %p193 = pneg %p192
      // Predicated region
      $region9: #{tpu_custom_call.1} parent=5 // pred_check
        _
      $region10: #{tpu_custom_call.1} parent=5 // pred_check_branch
        %195 = sbr.rel (%p192) target = $region12
      $region11: #{tpu_custom_call.1} parent=5 // pred_region
        %s196 = ssub.s32 %s19, 1
        // Predicated region
        $region13: #{tpu_custom_call.1} parent=11 // pred_check
          %p197 = pneg %p83
        $region14: #{tpu_custom_call.1} parent=11 // pred_check_branch
          %199 = sbr.rel (%p197) target = $region16
        $region15: #{tpu_custom_call.1} parent=11 // pred_region
          %s200 = smul.u32 4, %s29
          %202 = vsyncadd [#allocation6], 0
          %s203 = smul.addr %s200, 4
          %s204 = scalar_lea.hbm %s1, %s203
          %s205 = sshll.u32 %s204, 4
          %s206 = int_to_ptr.hbm [resolvable:$true] %s205
          %s207 = sshll.u32 [#allocation5], 4
          %s208 = int_to_ptr.vmem [resolvable:$true] %s207
          %213 = dma.hbm_to_vmem [thread:$0]  %s206, 4096, %s208, [#allocation6], 256, 256, 16
        $region16: #{tpu_custom_call.1} parent=11 // pred_fallthru
          _
        // Predicated region
        $region17: #{tpu_custom_call.1} parent=11 // pred_check
          %p214 = pneg %p109
        $region18: #{tpu_custom_call.1} parent=11 // pred_check_branch
          %216 = sbr.rel (%p214) target = $region20
        $region19: #{tpu_custom_call.1} parent=11 // pred_region
          %s217 = smul.u32 4, %s29
          %219 = vsyncadd [#allocation6], 0
          %s220 = scalar_lea.hbm %s2, %s217
          %s222 = sshll.u32 %s220, 4
          %s223 = int_to_ptr.hbm [resolvable:$true] %s222
          %s224 = sshll.u32 [#allocation7], 4
          %s225 = int_to_ptr.vmem [resolvable:$true] %s224
          %227 = dma.hbm_to_vmem [thread:$0]  %s223, 64, %s225, [#allocation6]
        $region20: #{tpu_custom_call.1} parent=11 // pred_fallthru
          _
        // Predicated region
        $region21: #{tpu_custom_call.1} parent=11 // pred_check
          %p228 = pneg %p135
        $region22: #{tpu_custom_call.1} parent=11 // pred_check_branch
          %230 = sbr.rel (%p228) target = $region24
        $region23: #{tpu_custom_call.1} parent=11 // pred_region
          %s231 = smul.u32 64, %s29
          %233 = vsyncadd [#allocation9], 0
          %s234 = smul.addr %s231, 4
          %s235 = scalar_lea.hbm %s3, %s234
          %s236 = sshll.u32 %s235, 4
          %s237 = int_to_ptr.hbm [resolvable:$true] %s236
          %s238 = sshll.u32 [#allocation8], 4
          %s239 = int_to_ptr.vmem [resolvable:$true] %s238
          %244 = dma.hbm_to_vmem [thread:$0]  %s237, 4096, %s239, [#allocation9], 64, 64, 4
        $region24: #{tpu_custom_call.1} parent=11 // pred_fallthru
          _
        // Predicated region
        $region25: #{tpu_custom_call.1} parent=11 // pred_check
          %p245 = pneg %p156
        $region26: #{tpu_custom_call.1} parent=11 // pred_check_branch
          %247 = sbr.rel (%p245) target = $region28
        $region27: #{tpu_custom_call.1} parent=11 // pred_region
          _
        $region28: #{tpu_custom_call.1} parent=11 // pred_fallthru
          _
      $region12: #{tpu_custom_call.1} parent=5 // pred_fallthru
        _
      %p248 = scmp.lt.s32.totalorder %s19, 2
      // Predicated region
      $region29: #{tpu_custom_call.1} parent=5 // pred_check
        %p249 = pneg %p248
      $region30: #{tpu_custom_call.1} parent=5 // pred_check_branch
        %251 = sbr.rel (%p249) target = $region32
      $region31: #{tpu_custom_call.1} parent=5 // pred_region
        // Predicated region
        $region33: #{tpu_custom_call.1} parent=31 // pred_check
          %p252 = pneg %p51
        $region34: #{tpu_custom_call.1} parent=31 // pred_check_branch
          %254 = sbr.rel (%p252) target = $region36
        $region35: #{tpu_custom_call.1} parent=31 // pred_region
          %s255 = sand.u32 %s41, 1
          %s256 = scalar_lea.sflag [#allocation3], %s255
          %s257 = sand.u32 %s41, 1
          %s258 = smul.addr %s257, 200
          %s259 = scalar_lea.vmem [#allocation2], %s258
          %s260 = smul.u32 25, %s26
          %262 = vsyncadd %s256, 0
          %s263 = smul.addr %s260, 8
          %s264 = scalar_lea.hbm %s0, %s263
          %s265 = sshll.u32 %s264, 4
          %s266 = int_to_ptr.hbm [resolvable:$true] %s265
          %s267 = sshll.u32 %s259, 4
          %s268 = int_to_ptr.vmem [resolvable:$true] %s267
          %273 = dma.hbm_to_vmem [thread:$0]  %s266, 3200, %s268, %s256, 128, 128, 8
        $region36: #{tpu_custom_call.1} parent=31 // pred_fallthru
          _
      $region32: #{tpu_custom_call.1} parent=5 // pred_fallthru
        _
      %p274 = scmp.le.s32.totalorder 1, %s19
      %p275 = scmp.lt.s32.totalorder %s19, 3
      %p276 = pnand %p274, %p275
      %p277 = pneg %p276
      // Predicated region
      $region37: #{tpu_custom_call.1} parent=5 // pred_check
        _
      $region38: #{tpu_custom_call.1} parent=5 // pred_check_branch
        %279 = sbr.rel (%p276) target = $region40
      $region39: #{tpu_custom_call.1} parent=5 // pred_region
        %s280 = ssub.s32 %s19, 1
        %s281 = sand.u32 %s44, 1
        %s282 = scalar_lea.sflag [#allocation3], %s281
        %s283 = sand.u32 %s44, 1
        %s284 = smul.addr %s283, 200
        %s285 = scalar_lea.vmem [#allocation2], %s284
        // Predicated region
        $region41: #{tpu_custom_call.1} parent=39 // pred_check
          %p286 = pneg %p57
        $region42: #{tpu_custom_call.1} parent=39 // pred_check_branch
          %288 = sbr.rel (%p286) target = $region44
        $region43: #{tpu_custom_call.1} parent=39 // pred_region
          %290 = dma.done %s282, 3200
        $region44: #{tpu_custom_call.1} parent=39 // pred_fallthru
          _
        // Predicated region
        $region45: #{tpu_custom_call.1} parent=39 // pred_check
          %p291 = pneg %p83
        $region46: #{tpu_custom_call.1} parent=39 // pred_check_branch
          %293 = sbr.rel (%p291) target = $region48
        $region47: #{tpu_custom_call.1} parent=39 // pred_region
          %295 = dma.done [#allocation6], 4096
        $region48: #{tpu_custom_call.1} parent=39 // pred_fallthru
          _
        // Predicated region
        $region49: #{tpu_custom_call.1} parent=39 // pred_check
          %p296 = pneg %p109
        $region50: #{tpu_custom_call.1} parent=39 // pred_check_branch
          %298 = sbr.rel (%p296) target = $region52
        $region51: #{tpu_custom_call.1} parent=39 // pred_region
          %300 = dma.done [#allocation6], 64
        $region52: #{tpu_custom_call.1} parent=39 // pred_fallthru
          _
        // Predicated region
        $region53: #{tpu_custom_call.1} parent=39 // pred_check
          %p301 = pneg %p135
        $region54: #{tpu_custom_call.1} parent=39 // pred_check_branch
          %303 = sbr.rel (%p301) target = $region56
        $region55: #{tpu_custom_call.1} parent=39 // pred_region
          %305 = dma.done [#allocation9], 4096
        $region56: #{tpu_custom_call.1} parent=39 // pred_fallthru
          _
        %s306 = sand.u32 %s44, 1
        %s307 = scalar_lea.sflag [#allocation3], %s306
        %s308 = sand.u32 %s44, 1
        %s309 = smul.addr %s308, 200
        %s310 = scalar_lea.vmem [#allocation2], %s309
        %p311 = pneg %p57
        %p312 = pneg %p54
        %p313 = pneg %p83
        %p314 = pneg %p80
        %p315 = pneg %p109
        %p316 = pneg %p106
        %p317 = pneg %p135
        %p318 = pneg %p132
        %p319 = pneg %p156
        %p320 = pneg %p153
        %p321 = pneg %p182
        %p322 = pneg %p179
        %s323 = sand.u32 %s169, 1
        %s324 = scalar_lea.sflag [#allocation4], %s323
        %s325 = sand.u32 %s169, 1
        %s326 = smul.addr %s325, 200
        %s327 = scalar_lea.vmem [#allocation10], %s326
        %s328 = smul.u32 25, %s28
        %s329 = smul.u32 4, %s29
        %s330 = smul.u32 4, %s29
        %s331 = smul.u32 64, %s29
        %s332 = smul.u32 25, %s28
        %p333 = scmp.eq.s32.totalorder %s29, 0
        // Predicated region
        $region57: #{tpu_custom_call.1} parent=39 // pred_check
          %p334 = pneg %p333
        $region58: #{tpu_custom_call.1} parent=39 // pred_check_branch
          %336 = sbr.rel (%p334) target = $region60
        $region59: #{tpu_custom_call.1} parent=39 // pred_region
          %v337 = vld [vmem:[%s4] sm:$0x1]
          %v339 = vperm.slane %v337, 0
          %341 = vst [vmem:[%s327] sm:$0xff] %v339
          %342 = vst [vmem:[%s327 + $0x8] sm:$0xff] %v339
          %343 = vst [vmem:[%s327 + $0x10] sm:$0xff] %v339
          %344 = vst [vmem:[%s327 + $0x18] sm:$0xff] %v339
          %345 = vst [vmem:[%s327 + $0x20] sm:$0xff] %v339
          %346 = vst [vmem:[%s327 + $0x28] sm:$0xff] %v339
          %347 = vst [vmem:[%s327 + $0x30] sm:$0xff] %v339
          %348 = vst [vmem:[%s327 + $0x38] sm:$0xff] %v339
          %349 = vst [vmem:[%s327 + $0x40] sm:$0xff] %v339
          %350 = vst [vmem:[%s327 + $0x48] sm:$0xff] %v339
          %351 = vst [vmem:[%s327 + $0x50] sm:$0xff] %v339
          %352 = vst [vmem:[%s327 + $0x58] sm:$0xff] %v339
          %353 = vst [vmem:[%s327 + $0x60] sm:$0xff] %v339
          %354 = vst [vmem:[%s327 + $0x68] sm:$0xff] %v339
          %355 = vst [vmem:[%s327 + $0x70] sm:$0xff] %v339
          %356 = vst [vmem:[%s327 + $0x78] sm:$0xff] %v339
          %357 = vst [vmem:[%s327 + $0x80] sm:$0xff] %v339
          %358 = vst [vmem:[%s327 + $0x88] sm:$0xff] %v339
          %359 = vst [vmem:[%s327 + $0x90] sm:$0xff] %v339
          %360 = vst [vmem:[%s327 + $0x98] sm:$0xff] %v339
          %361 = vst [vmem:[%s327 + $0xa0] sm:$0xff] %v339
          %362 = vst [vmem:[%s327 + $0xa8] sm:$0xff] %v339
          %363 = vst [vmem:[%s327 + $0xb0] sm:$0xff] %v339
          %364 = vst [vmem:[%s327 + $0xb8] sm:$0xff] %v339
          %365 = vst [vmem:[%s327 + $0xc0] sm:$0xff] %v339
        $region60: #{tpu_custom_call.1} parent=39 // pred_fallthru
          _
        %v366 = vld [vmem:[%s285] sm:$0xff]
        %v367 = vld [vmem:[%s285 + $0x8] sm:$0xff]
        %v368 = vld [vmem:[%s285 + $0x10] sm:$0xff]
        %v369 = vld [vmem:[%s285 + $0x18] sm:$0xff]
        %v370 = vld [vmem:[%s285 + $0x20] sm:$0xff]
        %v371 = vld [vmem:[%s285 + $0x28] sm:$0xff]
        %v372 = vld [vmem:[%s285 + $0x30] sm:$0xff]
        %v373 = vld [vmem:[%s285 + $0x38] sm:$0xff]
        %v374 = vld [vmem:[%s285 + $0x40] sm:$0xff]
        %v375 = vld [vmem:[%s285 + $0x48] sm:$0xff]
        %v376 = vld [vmem:[%s285 + $0x50] sm:$0xff]
        %v377 = vld [vmem:[%s285 + $0x58] sm:$0xff]
        %v378 = vld [vmem:[%s285 + $0x60] sm:$0xff]
        %v379 = vld [vmem:[%s285 + $0x68] sm:$0xff]
        %v380 = vld [vmem:[%s285 + $0x70] sm:$0xff]
        %v381 = vld [vmem:[%s285 + $0x78] sm:$0xff]
        %v382 = vld [vmem:[%s285 + $0x80] sm:$0xff]
        %v383 = vld [vmem:[%s285 + $0x88] sm:$0xff]
        %v384 = vld [vmem:[%s285 + $0x90] sm:$0xff]
        %v385 = vld [vmem:[%s285 + $0x98] sm:$0xff]
        %v386 = vld [vmem:[%s285 + $0xa0] sm:$0xff]
        %v387 = vld [vmem:[%s285 + $0xa8] sm:$0xff]
        %v388 = vld [vmem:[%s285 + $0xb0] sm:$0xff]
        %v389 = vld [vmem:[%s285 + $0xb8] sm:$0xff]
        %v390 = vld [vmem:[%s285 + $0xc0] sm:$0xff]
        %v391 = vpack.c.bf16 %v367, %v366
        %v392 = vpack.c.bf16 %v369, %v368
        %v393 = vpack.c.bf16 %v371, %v370
        %v394 = vpack.c.bf16 %v373, %v372
        %v395 = vpack.c.bf16 %v375, %v374
        %v396 = vpack.c.bf16 %v377, %v376
        %v397 = vpack.c.bf16 %v379, %v378
        %v398 = vpack.c.bf16 %v381, %v380
        %v399 = vpack.c.bf16 %v383, %v382
        %v400 = vpack.c.bf16 %v385, %v384
        %v401 = vpack.c.bf16 %v387, %v386
        %v402 = vpack.c.bf16 %v389, %v388
        %v403 = vpack.c.bf16 %v390, %v390
        %v404 = vld [vmem:[#allocation5] sm:$0xff]
        %v405 = vld [vmem:[#allocation5 + $0x8] sm:$0xff]
        %v406 = vld [vmem:[#allocation5 + $0x10] sm:$0xff]
        %v407 = vld [vmem:[#allocation5 + $0x18] sm:$0xff]
        %v408 = vld [vmem:[#allocation5 + $0x20] sm:$0xff]
        %v409 = vld [vmem:[#allocation5 + $0x28] sm:$0xff]
        %v410 = vld [vmem:[#allocation5 + $0x30] sm:$0xff]
        %v411 = vld [vmem:[#allocation5 + $0x38] sm:$0xff]
        %v412 = vld [vmem:[#allocation5 + $0x40] sm:$0xff]
        %v413 = vld [vmem:[#allocation5 + $0x48] sm:$0xff]
        %v414 = vld [vmem:[#allocation5 + $0x50] sm:$0xff]
        %v415 = vld [vmem:[#allocation5 + $0x58] sm:$0xff]
        %v416 = vld [vmem:[#allocation5 + $0x60] sm:$0xff]
        %v417 = vld [vmem:[#allocation5 + $0x68] sm:$0xff]
        %v418 = vld [vmem:[#allocation5 + $0x70] sm:$0xff]
        %v419 = vld [vmem:[#allocation5 + $0x78] sm:$0xff]
        %v420 = vld [vmem:[#allocation5 + $0x80] sm:$0xff]
        %v421 = vld [vmem:[#allocation5 + $0x88] sm:$0xff]
        %v422 = vld [vmem:[#allocation5 + $0x90] sm:$0xff]
        %v423 = vld [vmem:[#allocation5 + $0x98] sm:$0xff]
        %v424 = vld [vmem:[#allocation5 + $0xa0] sm:$0xff]
        %v425 = vld [vmem:[#allocation5 + $0xa8] sm:$0xff]
        %v426 = vld [vmem:[#allocation5 + $0xb0] sm:$0xff]
        %v427 = vld [vmem:[#allocation5 + $0xb8] sm:$0xff]
        %v428 = vld [vmem:[#allocation5 + $0xc0] sm:$0xff]
        %v429 = vld [vmem:[#allocation5 + $0xc8] sm:$0xff]
        %v430 = vld [vmem:[#allocation5 + $0xd0] sm:$0xff]
        %v431 = vld [vmem:[#allocation5 + $0xd8] sm:$0xff]
        %v432 = vld [vmem:[#allocation5 + $0xe0] sm:$0xff]
        %v433 = vld [vmem:[#allocation5 + $0xe8] sm:$0xff]
        %v434 = vld [vmem:[#allocation5 + $0xf0] sm:$0xff]
        %v435 = vld [vmem:[#allocation5 + $0xf8] sm:$0xff]
        %v436 = vld [vmem:[#allocation7] sm:$0xf]
        %v438 = vperm.slane %v436, 0
        %v439 = vperm.slane %v436, 1
        %v440 = vperm.slane %v436, 2
        %v441 = vperm.slane %v436, 3
        %v478 = vunpack.c.l.b16 %v404
        %v479 = vunpack.c.h.b16 %v404
        %v480 = vunpack.c.l.b16 %v405
        %v481 = vunpack.c.h.b16 %v405
        %v482 = vunpack.c.l.b16 %v406
        %v483 = vunpack.c.h.b16 %v406
        %v484 = vunpack.c.l.b16 %v407
        %v485 = vunpack.c.h.b16 %v407
        %v486 = vunpack.c.l.b16 %v408
        %v487 = vunpack.c.h.b16 %v408
        %v488 = vunpack.c.l.b16 %v409
        %v489 = vunpack.c.h.b16 %v409
        %v490 = vunpack.c.l.b16 %v410
        %v491 = vunpack.c.h.b16 %v410
        %v492 = vunpack.c.l.b16 %v411
        %v493 = vunpack.c.h.b16 %v411
        %v494 = vunpack.c.l.b16 %v412
        %v495 = vunpack.c.h.b16 %v412
        %v496 = vunpack.c.l.b16 %v413
        %v497 = vunpack.c.h.b16 %v413
        %v498 = vunpack.c.l.b16 %v414
        %v499 = vunpack.c.h.b16 %v414
        %v500 = vunpack.c.l.b16 %v415
        %v501 = vunpack.c.h.b16 %v415
        %v502 = vunpack.c.l.b16 %v416
        %v503 = vunpack.c.h.b16 %v416
        %v504 = vunpack.c.l.b16 %v417
        %v505 = vunpack.c.h.b16 %v417
        %v506 = vunpack.c.l.b16 %v418
        %v507 = vunpack.c.h.b16 %v418
        %v508 = vunpack.c.l.b16 %v419
        %v509 = vunpack.c.h.b16 %v419
        %v510 = vunpack.c.l.b16 %v420
        %v511 = vunpack.c.h.b16 %v420
        %v512 = vunpack.c.l.b16 %v421
        %v513 = vunpack.c.h.b16 %v421
        %v514 = vunpack.c.l.b16 %v422
        %v515 = vunpack.c.h.b16 %v422
        %v516 = vunpack.c.l.b16 %v423
        %v517 = vunpack.c.h.b16 %v423
        %v518 = vunpack.c.l.b16 %v424
        %v519 = vunpack.c.h.b16 %v424
        %v520 = vunpack.c.l.b16 %v425
        %v521 = vunpack.c.h.b16 %v425
        %v522 = vunpack.c.l.b16 %v426
        %v523 = vunpack.c.h.b16 %v426
        %v524 = vunpack.c.l.b16 %v427
        %v525 = vunpack.c.h.b16 %v427
        %v526 = vunpack.c.l.b16 %v428
        %v527 = vunpack.c.h.b16 %v428
        %v528 = vunpack.c.l.b16 %v429
        %v529 = vunpack.c.h.b16 %v429
        %v530 = vunpack.c.l.b16 %v430
        %v531 = vunpack.c.h.b16 %v430
        %v532 = vunpack.c.l.b16 %v431
        %v533 = vunpack.c.h.b16 %v431
        %v534 = vunpack.c.l.b16 %v432
        %v535 = vunpack.c.h.b16 %v432
        %v536 = vunpack.c.l.b16 %v433
        %v537 = vunpack.c.h.b16 %v433
        %v538 = vunpack.c.l.b16 %v434
        %v539 = vunpack.c.h.b16 %v434
        %v540 = vunpack.c.l.b16 %v435
        %v541 = vunpack.c.h.b16 %v435
        %v542 = vpack.c.b16 %v482, %v478
        %v543 = vpack.c.b16 %v483, %v479
        %v544 = vpack.c.b16 %v484, %v480
        %v545 = vpack.c.b16 %v485, %v481
        %v546 = vpack.c.b16 %v490, %v486
        %v547 = vpack.c.b16 %v491, %v487
        %v548 = vpack.c.b16 %v492, %v488
        %v549 = vpack.c.b16 %v493, %v489
        %v550 = vpack.c.b16 %v498, %v494
        %v551 = vpack.c.b16 %v499, %v495
        %v552 = vpack.c.b16 %v500, %v496
        %v553 = vpack.c.b16 %v501, %v497
        %v554 = vpack.c.b16 %v506, %v502
        %v555 = vpack.c.b16 %v507, %v503
        %v556 = vpack.c.b16 %v508, %v504
        %v557 = vpack.c.b16 %v509, %v505
        %v558 = vpack.c.b16 %v514, %v510
        %v559 = vpack.c.b16 %v515, %v511
        %v560 = vpack.c.b16 %v516, %v512
        %v561 = vpack.c.b16 %v517, %v513
        %v562 = vpack.c.b16 %v522, %v518
        %v563 = vpack.c.b16 %v523, %v519
        %v564 = vpack.c.b16 %v524, %v520
        %v565 = vpack.c.b16 %v525, %v521
        %v566 = vpack.c.b16 %v530, %v526
        %v567 = vpack.c.b16 %v531, %v527
        %v568 = vpack.c.b16 %v532, %v528
        %v569 = vpack.c.b16 %v533, %v529
        %v570 = vpack.c.b16 %v538, %v534
        %v571 = vpack.c.b16 %v539, %v535
        %v572 = vpack.c.b16 %v540, %v536
        %v573 = vpack.c.b16 %v541, %v537
        %606 = vmatpush.bf16.msra.mxu0 %v570
        %607 = vmatpush.bf16.msra.mxu0 %v566
        %608 = vmatpush.bf16.msra.mxu0 %v562
        %609 = vmatpush.bf16.msra.mxu0 %v558
        %610 = vmatpush.bf16.msra.mxu0 %v554
        %611 = vmatpush.bf16.msra.mxu0 %v550
        %612 = vmatpush.bf16.msra.mxu0 %v546
        %613 = vmatpush.bf16.msra.mxu0 %v542
        %614 = vmatmul.bf16.gmra.mxu0 %v391
        %v615 = vpop.f32.mrf.mxu0
        %v616 = vadd.f32 %v438, %v615
        %v617 = vpop.f32.mrf.mxu0
        %v618 = vadd.f32 %v438, %v617
        %619 = vmatmul.bf16.gmra.mxu0 %v392
        %v620 = vpop.f32.mrf.mxu0
        %v621 = vadd.f32 %v438, %v620
        %v622 = vpop.f32.mrf.mxu0
        %v623 = vadd.f32 %v438, %v622
        %624 = vmatmul.bf16.gmra.mxu0 %v393
        %v625 = vpop.f32.mrf.mxu0
        %v626 = vadd.f32 %v438, %v625
        %v627 = vpop.f32.mrf.mxu0
        %v628 = vadd.f32 %v438, %v627
        %629 = vmatmul.bf16.gmra.mxu0 %v394
        %v630 = vpop.f32.mrf.mxu0
        %v631 = vadd.f32 %v438, %v630
        %v632 = vpop.f32.mrf.mxu0
        %v633 = vadd.f32 %v438, %v632
        %634 = vmatmul.bf16.gmra.mxu0 %v395
        %v635 = vpop.f32.mrf.mxu0
        %v636 = vadd.f32 %v438, %v635
        %v637 = vpop.f32.mrf.mxu0
        %v638 = vadd.f32 %v438, %v637
        %639 = vmatmul.bf16.gmra.mxu0 %v396
        %v640 = vpop.f32.mrf.mxu0
        %v641 = vadd.f32 %v438, %v640
        %v642 = vpop.f32.mrf.mxu0
        %v643 = vadd.f32 %v438, %v642
        %644 = vmatmul.bf16.gmra.mxu0 %v397
        %v645 = vpop.f32.mrf.mxu0
        %v646 = vadd.f32 %v438, %v645
        %v647 = vpop.f32.mrf.mxu0
        %v648 = vadd.f32 %v438, %v647
        %649 = vmatmul.bf16.gmra.mxu0 %v398
        %v650 = vpop.f32.mrf.mxu0
        %v651 = vadd.f32 %v438, %v650
        %v652 = vpop.f32.mrf.mxu0
        %v653 = vadd.f32 %v438, %v652
        %654 = vmatmul.bf16.gmra.mxu0 %v399
        %v655 = vpop.f32.mrf.mxu0
        %v656 = vadd.f32 %v438, %v655
        %v657 = vpop.f32.mrf.mxu0
        %v658 = vadd.f32 %v438, %v657
        %659 = vmatmul.bf16.gmra.mxu0 %v400
        %v660 = vpop.f32.mrf.mxu0
        %v661 = vadd.f32 %v438, %v660
        %v662 = vpop.f32.mrf.mxu0
        %v663 = vadd.f32 %v438, %v662
        %664 = vmatmul.bf16.gmra.mxu0 %v401
        %v665 = vpop.f32.mrf.mxu0
        %v666 = vadd.f32 %v438, %v665
        %v667 = vpop.f32.mrf.mxu0
        %v668 = vadd.f32 %v438, %v667
        %669 = vmatmul.bf16.gmra.mxu0 %v402
        %v670 = vpop.f32.mrf.mxu0
        %v671 = vadd.f32 %v438, %v670
        %v672 = vpop.f32.mrf.mxu0
        %v673 = vadd.f32 %v438, %v672
        %674 = vmatmul.bf16.gmra.mxu0 %v403
        %v675 = vpop.f32.mrf.mxu0
        %v676 = vadd.f32 %v438, %v675
        %v677 = vpop.f32.mrf.mxu0
        %678 = vdwg.mxu0
        %679 = vmatpush.bf16.msra.mxu0 %v571
        %680 = vmatpush.bf16.msra.mxu0 %v567
        %681 = vmatpush.bf16.msra.mxu0 %v563
        %682 = vmatpush.bf16.msra.mxu0 %v559
        %683 = vmatpush.bf16.msra.mxu0 %v555
        %684 = vmatpush.bf16.msra.mxu0 %v551
        %685 = vmatpush.bf16.msra.mxu0 %v547
        %686 = vmatpush.bf16.msra.mxu0 %v543
        %687 = vmatmul.bf16.gmra.mxu0 %v391
        %v688 = vpop.f32.mrf.mxu0
        %v689 = vadd.f32 %v439, %v688
        %v690 = vpop.f32.mrf.mxu0
        %v691 = vadd.f32 %v439, %v690
        %692 = vmatmul.bf16.gmra.mxu0 %v392
        %v693 = vpop.f32.mrf.mxu0
        %v694 = vadd.f32 %v439, %v693
        %v695 = vpop.f32.mrf.mxu0
        %v696 = vadd.f32 %v439, %v695
        %697 = vmatmul.bf16.gmra.mxu0 %v393
        %v698 = vpop.f32.mrf.mxu0
        %v699 = vadd.f32 %v439, %v698
        %v700 = vpop.f32.mrf.mxu0
        %v701 = vadd.f32 %v439, %v700
        %702 = vmatmul.bf16.gmra.mxu0 %v394
        %v703 = vpop.f32.mrf.mxu0
        %v704 = vadd.f32 %v439, %v703
        %v705 = vpop.f32.mrf.mxu0
        %v706 = vadd.f32 %v439, %v705
        %707 = vmatmul.bf16.gmra.mxu0 %v395
        %v708 = vpop.f32.mrf.mxu0
        %v709 = vadd.f32 %v439, %v708
        %v710 = vpop.f32.mrf.mxu0
        %v711 = vadd.f32 %v439, %v710
        %712 = vmatmul.bf16.gmra.mxu0 %v396
        %v713 = vpop.f32.mrf.mxu0
        %v714 = vadd.f32 %v439, %v713
        %v715 = vpop.f32.mrf.mxu0
        %v716 = vadd.f32 %v439, %v715
        %717 = vmatmul.bf16.gmra.mxu0 %v397
        %v718 = vpop.f32.mrf.mxu0
        %v719 = vadd.f32 %v439, %v718
        %v720 = vpop.f32.mrf.mxu0
        %v721 = vadd.f32 %v439, %v720
        %722 = vmatmul.bf16.gmra.mxu0 %v398
        %v723 = vpop.f32.mrf.mxu0
        %v724 = vadd.f32 %v439, %v723
        %v725 = vpop.f32.mrf.mxu0
        %v726 = vadd.f32 %v439, %v725
        %727 = vmatmul.bf16.gmra.mxu0 %v399
        %v728 = vpop.f32.mrf.mxu0
        %v729 = vadd.f32 %v439, %v728
        %v730 = vpop.f32.mrf.mxu0
        %v731 = vadd.f32 %v439, %v730
        %732 = vmatmul.bf16.gmra.mxu0 %v400
        %v733 = vpop.f32.mrf.mxu0
        %v734 = vadd.f32 %v439, %v733
        %v735 = vpop.f32.mrf.mxu0
        %v736 = vadd.f32 %v439, %v735
        %737 = vmatmul.bf16.gmra.mxu0 %v401
        %v738 = vpop.f32.mrf.mxu0
        %v739 = vadd.f32 %v439, %v738
        %v740 = vpop.f32.mrf.mxu0
        %v741 = vadd.f32 %v439, %v740
        %742 = vmatmul.bf16.gmra.mxu0 %v402
        %v743 = vpop.f32.mrf.mxu0
        %v744 = vadd.f32 %v439, %v743
        %v745 = vpop.f32.mrf.mxu0
        %v746 = vadd.f32 %v439, %v745
        %747 = vmatmul.bf16.gmra.mxu0 %v403
        %v748 = vpop.f32.mrf.mxu0
        %v749 = vadd.f32 %v439, %v748
        %v750 = vpop.f32.mrf.mxu0
        %751 = vdwg.mxu0
        %752 = vmatpush.bf16.msra.mxu0 %v572
        %753 = vmatpush.bf16.msra.mxu0 %v568
        %754 = vmatpush.bf16.msra.mxu0 %v564
        %755 = vmatpush.bf16.msra.mxu0 %v560
        %756 = vmatpush.bf16.msra.mxu0 %v556
        %757 = vmatpush.bf16.msra.mxu0 %v552
        %758 = vmatpush.bf16.msra.mxu0 %v548
        %759 = vmatpush.bf16.msra.mxu0 %v544
        %760 = vmatmul.bf16.gmra.mxu0 %v391
        %v761 = vpop.f32.mrf.mxu0
        %v762 = vadd.f32 %v440, %v761
        %v763 = vpop.f32.mrf.mxu0
        %v764 = vadd.f32 %v440, %v763
        %765 = vmatmul.bf16.gmra.mxu0 %v392
        %v766 = vpop.f32.mrf.mxu0
        %v767 = vadd.f32 %v440, %v766
        %v768 = vpop.f32.mrf.mxu0
        %v769 = vadd.f32 %v440, %v768
        %770 = vmatmul.bf16.gmra.mxu0 %v393
        %v771 = vpop.f32.mrf.mxu0
        %v772 = vadd.f32 %v440, %v771
        %v773 = vpop.f32.mrf.mxu0
        %v774 = vadd.f32 %v440, %v773
        %775 = vmatmul.bf16.gmra.mxu0 %v394
        %v776 = vpop.f32.mrf.mxu0
        %v777 = vadd.f32 %v440, %v776
        %v778 = vpop.f32.mrf.mxu0
        %v779 = vadd.f32 %v440, %v778
        %780 = vmatmul.bf16.gmra.mxu0 %v395
        %v781 = vpop.f32.mrf.mxu0
        %v782 = vadd.f32 %v440, %v781
        %v783 = vpop.f32.mrf.mxu0
        %v784 = vadd.f32 %v440, %v783
        %785 = vmatmul.bf16.gmra.mxu0 %v396
        %v786 = vpop.f32.mrf.mxu0
        %v787 = vadd.f32 %v440, %v786
        %v788 = vpop.f32.mrf.mxu0
        %v789 = vadd.f32 %v440, %v788
        %790 = vmatmul.bf16.gmra.mxu0 %v397
        %v791 = vpop.f32.mrf.mxu0
        %v792 = vadd.f32 %v440, %v791
        %v793 = vpop.f32.mrf.mxu0
        %v794 = vadd.f32 %v440, %v793
        %795 = vmatmul.bf16.gmra.mxu0 %v398
        %v796 = vpop.f32.mrf.mxu0
        %v797 = vadd.f32 %v440, %v796
        %v798 = vpop.f32.mrf.mxu0
        %v799 = vadd.f32 %v440, %v798
        %800 = vmatmul.bf16.gmra.mxu0 %v399
        %v801 = vpop.f32.mrf.mxu0
        %v802 = vadd.f32 %v440, %v801
        %v803 = vpop.f32.mrf.mxu0
        %v804 = vadd.f32 %v440, %v803
        %805 = vmatmul.bf16.gmra.mxu0 %v400
        %v806 = vpop.f32.mrf.mxu0
        %v807 = vadd.f32 %v440, %v806
        %v808 = vpop.f32.mrf.mxu0
        %v809 = vadd.f32 %v440, %v808
        %810 = vmatmul.bf16.gmra.mxu0 %v401
        %v811 = vpop.f32.mrf.mxu0
        %v812 = vadd.f32 %v440, %v811
        %v813 = vpop.f32.mrf.mxu0
        %v814 = vadd.f32 %v440, %v813
        %815 = vmatmul.bf16.gmra.mxu0 %v402
        %v816 = vpop.f32.mrf.mxu0
        %v817 = vadd.f32 %v440, %v816
        %v818 = vpop.f32.mrf.mxu0
        %v819 = vadd.f32 %v440, %v818
        %820 = vmatmul.bf16.gmra.mxu0 %v403
        %v821 = vpop.f32.mrf.mxu0
        %v822 = vadd.f32 %v440, %v821
        %v823 = vpop.f32.mrf.mxu0
        %824 = vdwg.mxu0
        %825 = vmatpush.bf16.msra.mxu0 %v573
        %826 = vmatpush.bf16.msra.mxu0 %v569
        %827 = vmatpush.bf16.msra.mxu0 %v565
        %828 = vmatpush.bf16.msra.mxu0 %v561
        %829 = vmatpush.bf16.msra.mxu0 %v557
        %830 = vmatpush.bf16.msra.mxu0 %v553
        %831 = vmatpush.bf16.msra.mxu0 %v549
        %832 = vmatpush.bf16.msra.mxu0 %v545
        %833 = vmatmul.bf16.gmra.mxu0 %v391
        %v834 = vpop.f32.mrf.mxu0
        %v835 = vadd.f32 %v441, %v834
        %v836 = vpop.f32.mrf.mxu0
        %v837 = vadd.f32 %v441, %v836
        %838 = vmatmul.bf16.gmra.mxu0 %v392
        %v839 = vpop.f32.mrf.mxu0
        %v840 = vadd.f32 %v441, %v839
        %v841 = vpop.f32.mrf.mxu0
        %v842 = vadd.f32 %v441, %v841
        %843 = vmatmul.bf16.gmra.mxu0 %v393
        %v844 = vpop.f32.mrf.mxu0
        %v845 = vadd.f32 %v441, %v844
        %v846 = vpop.f32.mrf.mxu0
        %v847 = vadd.f32 %v441, %v846
        %848 = vmatmul.bf16.gmra.mxu0 %v394
        %v849 = vpop.f32.mrf.mxu0
        %v850 = vadd.f32 %v441, %v849
        %v851 = vpop.f32.mrf.mxu0
        %v852 = vadd.f32 %v441, %v851
        %853 = vmatmul.bf16.gmra.mxu0 %v395
        %v854 = vpop.f32.mrf.mxu0
        %v855 = vadd.f32 %v441, %v854
        %v856 = vpop.f32.mrf.mxu0
        %v857 = vadd.f32 %v441, %v856
        %858 = vmatmul.bf16.gmra.mxu0 %v396
        %v859 = vpop.f32.mrf.mxu0
        %v860 = vadd.f32 %v441, %v859
        %v861 = vpop.f32.mrf.mxu0
        %v862 = vadd.f32 %v441, %v861
        %863 = vmatmul.bf16.gmra.mxu0 %v397
        %v864 = vpop.f32.mrf.mxu0
        %v865 = vadd.f32 %v441, %v864
        %v866 = vpop.f32.mrf.mxu0
        %v867 = vadd.f32 %v441, %v866
        %868 = vmatmul.bf16.gmra.mxu0 %v398
        %v869 = vpop.f32.mrf.mxu0
        %v870 = vadd.f32 %v441, %v869
        %v871 = vpop.f32.mrf.mxu0
        %v872 = vadd.f32 %v441, %v871
        %873 = vmatmul.bf16.gmra.mxu0 %v399
        %v874 = vpop.f32.mrf.mxu0
        %v875 = vadd.f32 %v441, %v874
        %v876 = vpop.f32.mrf.mxu0
        %v877 = vadd.f32 %v441, %v876
        %878 = vmatmul.bf16.gmra.mxu0 %v400
        %v879 = vpop.f32.mrf.mxu0
        %v880 = vadd.f32 %v441, %v879
        %v881 = vpop.f32.mrf.mxu0
        %v882 = vadd.f32 %v441, %v881
        %883 = vmatmul.bf16.gmra.mxu0 %v401
        %v884 = vpop.f32.mrf.mxu0
        %v885 = vadd.f32 %v441, %v884
        %v886 = vpop.f32.mrf.mxu0
        %v887 = vadd.f32 %v441, %v886
        %888 = vmatmul.bf16.gmra.mxu0 %v402
        %v889 = vpop.f32.mrf.mxu0
        %v890 = vadd.f32 %v441, %v889
        %v891 = vpop.f32.mrf.mxu0
        %v892 = vadd.f32 %v441, %v891
        %893 = vmatmul.bf16.gmra.mxu0 %v403
        %v894 = vpop.f32.mrf.mxu0
        %v895 = vadd.f32 %v441, %v894
        %v896 = vpop.f32.mrf.mxu0
        %897 = vdwg.mxu0
        %v898 = vmax.f32 %v616, 0.0
        %v899 = vmax.f32 %v689, 0.0
        %v900 = vmax.f32 %v762, 0.0
        %v901 = vmax.f32 %v835, 0.0
        %v902 = vmax.f32 %v618, 0.0
        %v903 = vmax.f32 %v691, 0.0
        %v904 = vmax.f32 %v764, 0.0
        %v905 = vmax.f32 %v837, 0.0
        %v906 = vmax.f32 %v621, 0.0
        %v907 = vmax.f32 %v694, 0.0
        %v908 = vmax.f32 %v767, 0.0
        %v909 = vmax.f32 %v840, 0.0
        %v910 = vmax.f32 %v623, 0.0
        %v911 = vmax.f32 %v696, 0.0
        %v912 = vmax.f32 %v769, 0.0
        %v913 = vmax.f32 %v842, 0.0
        %v914 = vmax.f32 %v626, 0.0
        %v915 = vmax.f32 %v699, 0.0
        %v916 = vmax.f32 %v772, 0.0
        %v917 = vmax.f32 %v845, 0.0
        %v918 = vmax.f32 %v628, 0.0
        %v919 = vmax.f32 %v701, 0.0
        %v920 = vmax.f32 %v774, 0.0
        %v921 = vmax.f32 %v847, 0.0
        %v922 = vmax.f32 %v631, 0.0
        %v923 = vmax.f32 %v704, 0.0
        %v924 = vmax.f32 %v777, 0.0
        %v925 = vmax.f32 %v850, 0.0
        %v926 = vmax.f32 %v633, 0.0
        %v927 = vmax.f32 %v706, 0.0
        %v928 = vmax.f32 %v779, 0.0
        %v929 = vmax.f32 %v852, 0.0
        %v930 = vmax.f32 %v636, 0.0
        %v931 = vmax.f32 %v709, 0.0
        %v932 = vmax.f32 %v782, 0.0
        %v933 = vmax.f32 %v855, 0.0
        %v934 = vmax.f32 %v638, 0.0
        %v935 = vmax.f32 %v711, 0.0
        %v936 = vmax.f32 %v784, 0.0
        %v937 = vmax.f32 %v857, 0.0
        %v938 = vmax.f32 %v641, 0.0
        %v939 = vmax.f32 %v714, 0.0
        %v940 = vmax.f32 %v787, 0.0
        %v941 = vmax.f32 %v860, 0.0
        %v942 = vmax.f32 %v643, 0.0
        %v943 = vmax.f32 %v716, 0.0
        %v944 = vmax.f32 %v789, 0.0
        %v945 = vmax.f32 %v862, 0.0
        %v946 = vmax.f32 %v646, 0.0
        %v947 = vmax.f32 %v719, 0.0
        %v948 = vmax.f32 %v792, 0.0
        %v949 = vmax.f32 %v865, 0.0
        %v950 = vmax.f32 %v648, 0.0
        %v951 = vmax.f32 %v721, 0.0
        %v952 = vmax.f32 %v794, 0.0
        %v953 = vmax.f32 %v867, 0.0
        %v954 = vmax.f32 %v651, 0.0
        %v955 = vmax.f32 %v724, 0.0
        %v956 = vmax.f32 %v797, 0.0
        %v957 = vmax.f32 %v870, 0.0
        %v958 = vmax.f32 %v653, 0.0
        %v959 = vmax.f32 %v726, 0.0
        %v960 = vmax.f32 %v799, 0.0
        %v961 = vmax.f32 %v872, 0.0
        %v962 = vmax.f32 %v656, 0.0
        %v963 = vmax.f32 %v729, 0.0
        %v964 = vmax.f32 %v802, 0.0
        %v965 = vmax.f32 %v875, 0.0
        %v966 = vmax.f32 %v658, 0.0
        %v967 = vmax.f32 %v731, 0.0
        %v968 = vmax.f32 %v804, 0.0
        %v969 = vmax.f32 %v877, 0.0
        %v970 = vmax.f32 %v661, 0.0
        %v971 = vmax.f32 %v734, 0.0
        %v972 = vmax.f32 %v807, 0.0
        %v973 = vmax.f32 %v880, 0.0
        %v974 = vmax.f32 %v663, 0.0
        %v975 = vmax.f32 %v736, 0.0
        %v976 = vmax.f32 %v809, 0.0
        %v977 = vmax.f32 %v882, 0.0
        %v978 = vmax.f32 %v666, 0.0
        %v979 = vmax.f32 %v739, 0.0
        %v980 = vmax.f32 %v812, 0.0
        %v981 = vmax.f32 %v885, 0.0
        %v982 = vmax.f32 %v668, 0.0
        %v983 = vmax.f32 %v741, 0.0
        %v984 = vmax.f32 %v814, 0.0
        %v985 = vmax.f32 %v887, 0.0
        %v986 = vmax.f32 %v671, 0.0
        %v987 = vmax.f32 %v744, 0.0
        %v988 = vmax.f32 %v817, 0.0
        %v989 = vmax.f32 %v890, 0.0
        %v990 = vmax.f32 %v673, 0.0
        %v991 = vmax.f32 %v746, 0.0
        %v992 = vmax.f32 %v819, 0.0
        %v993 = vmax.f32 %v892, 0.0
        %v994 = vmax.f32 %v676, 0.0
        %v995 = vmax.f32 %v749, 0.0
        %v996 = vmax.f32 %v822, 0.0
        %v997 = vmax.f32 %v895, 0.0
        %v998 = vld [vmem:[%s327] sm:$0xff]
        %v999 = vld [vmem:[%s327 + $0x8] sm:$0xff]
        %v1000 = vld [vmem:[%s327 + $0x10] sm:$0xff]
        %v1001 = vld [vmem:[%s327 + $0x18] sm:$0xff]
        %v1002 = vld [vmem:[%s327 + $0x20] sm:$0xff]
        %v1003 = vld [vmem:[%s327 + $0x28] sm:$0xff]
        %v1004 = vld [vmem:[%s327 + $0x30] sm:$0xff]
        %v1005 = vld [vmem:[%s327 + $0x38] sm:$0xff]
        %v1006 = vld [vmem:[%s327 + $0x40] sm:$0xff]
        %v1007 = vld [vmem:[%s327 + $0x48] sm:$0xff]
        %v1008 = vld [vmem:[%s327 + $0x50] sm:$0xff]
        %v1009 = vld [vmem:[%s327 + $0x58] sm:$0xff]
        %v1010 = vld [vmem:[%s327 + $0x60] sm:$0xff]
        %v1011 = vld [vmem:[%s327 + $0x68] sm:$0xff]
        %v1012 = vld [vmem:[%s327 + $0x70] sm:$0xff]
        %v1013 = vld [vmem:[%s327 + $0x78] sm:$0xff]
        %v1014 = vld [vmem:[%s327 + $0x80] sm:$0xff]
        %v1015 = vld [vmem:[%s327 + $0x88] sm:$0xff]
        %v1016 = vld [vmem:[%s327 + $0x90] sm:$0xff]
        %v1017 = vld [vmem:[%s327 + $0x98] sm:$0xff]
        %v1018 = vld [vmem:[%s327 + $0xa0] sm:$0xff]
        %v1019 = vld [vmem:[%s327 + $0xa8] sm:$0xff]
        %v1020 = vld [vmem:[%s327 + $0xb0] sm:$0xff]
        %v1021 = vld [vmem:[%s327 + $0xb8] sm:$0xff]
        %v1022 = vld [vmem:[%s327 + $0xc0] sm:$0xff]
        %v1023 = vpack.c.bf16 %v902, %v898
        %v1024 = vpack.c.bf16 %v903, %v899
        %v1025 = vpack.c.bf16 %v904, %v900
        %v1026 = vpack.c.bf16 %v905, %v901
        %v1027 = vpack.c.bf16 %v910, %v906
        %v1028 = vpack.c.bf16 %v911, %v907
        %v1029 = vpack.c.bf16 %v912, %v908
        %v1030 = vpack.c.bf16 %v913, %v909
        %v1031 = vpack.c.bf16 %v918, %v914
        %v1032 = vpack.c.bf16 %v919, %v915
        %v1033 = vpack.c.bf16 %v920, %v916
        %v1034 = vpack.c.bf16 %v921, %v917
        %v1035 = vpack.c.bf16 %v926, %v922
        %v1036 = vpack.c.bf16 %v927, %v923
        %v1037 = vpack.c.bf16 %v928, %v924
        %v1038 = vpack.c.bf16 %v929, %v925
        %v1039 = vpack.c.bf16 %v934, %v930
        %v1040 = vpack.c.bf16 %v935, %v931
        %v1041 = vpack.c.bf16 %v936, %v932
        %v1042 = vpack.c.bf16 %v937, %v933
        %v1043 = vpack.c.bf16 %v942, %v938
        %v1044 = vpack.c.bf16 %v943, %v939
        %v1045 = vpack.c.bf16 %v944, %v940
        %v1046 = vpack.c.bf16 %v945, %v941
        %v1047 = vpack.c.bf16 %v950, %v946
        %v1048 = vpack.c.bf16 %v951, %v947
        %v1049 = vpack.c.bf16 %v952, %v948
        %v1050 = vpack.c.bf16 %v953, %v949
        %v1051 = vpack.c.bf16 %v958, %v954
        %v1052 = vpack.c.bf16 %v959, %v955
        %v1053 = vpack.c.bf16 %v960, %v956
        %v1054 = vpack.c.bf16 %v961, %v957
        %v1055 = vpack.c.bf16 %v966, %v962
        %v1056 = vpack.c.bf16 %v967, %v963
        %v1057 = vpack.c.bf16 %v968, %v964
        %v1058 = vpack.c.bf16 %v969, %v965
        %v1059 = vpack.c.bf16 %v974, %v970
        %v1060 = vpack.c.bf16 %v975, %v971
        %v1061 = vpack.c.bf16 %v976, %v972
        %v1062 = vpack.c.bf16 %v977, %v973
        %v1063 = vpack.c.bf16 %v982, %v978
        %v1064 = vpack.c.bf16 %v983, %v979
        %v1065 = vpack.c.bf16 %v984, %v980
        %v1066 = vpack.c.bf16 %v985, %v981
        %v1067 = vpack.c.bf16 %v990, %v986
        %v1068 = vpack.c.bf16 %v991, %v987
        %v1069 = vpack.c.bf16 %v992, %v988
        %v1070 = vpack.c.bf16 %v993, %v989
        %v1071 = vpack.c.bf16 %v994, %v994
        %v1072 = vpack.c.bf16 %v995, %v995
        %v1073 = vpack.c.bf16 %v996, %v996
        %v1074 = vpack.c.bf16 %v997, %v997
        %v1075 = vld [vmem:[#allocation8] sm:$0xf]
        %v1076 = vld [vmem:[#allocation8 + $0x4] sm:$0xf]
        %v1077 = vld [vmem:[#allocation8 + $0x8] sm:$0xf]
        %v1078 = vld [vmem:[#allocation8 + $0xc] sm:$0xf]
        %v1079 = vld [vmem:[#allocation8 + $0x10] sm:$0xf]
        %v1080 = vld [vmem:[#allocation8 + $0x14] sm:$0xf]
        %v1081 = vld [vmem:[#allocation8 + $0x18] sm:$0xf]
        %v1082 = vld [vmem:[#allocation8 + $0x1c] sm:$0xf]
        %v1083 = vld [vmem:[#allocation8 + $0x20] sm:$0xf]
        %v1084 = vld [vmem:[#allocation8 + $0x24] sm:$0xf]
        %v1085 = vld [vmem:[#allocation8 + $0x28] sm:$0xf]
        %v1086 = vld [vmem:[#allocation8 + $0x2c] sm:$0xf]
        %v1087 = vld [vmem:[#allocation8 + $0x30] sm:$0xf]
        %v1088 = vld [vmem:[#allocation8 + $0x34] sm:$0xf]
        %v1089 = vld [vmem:[#allocation8 + $0x38] sm:$0xf]
        %v1090 = vld [vmem:[#allocation8 + $0x3c] sm:$0xf]
        %v1091 = vld [vmem:[#allocation8 + $0x40] sm:$0xf]
        %v1092 = vld [vmem:[#allocation8 + $0x44] sm:$0xf]
        %v1093 = vld [vmem:[#allocation8 + $0x48] sm:$0xf]
        %v1094 = vld [vmem:[#allocation8 + $0x4c] sm:$0xf]
        %v1095 = vld [vmem:[#allocation8 + $0x50] sm:$0xf]
        %v1096 = vld [vmem:[#allocation8 + $0x54] sm:$0xf]
        %v1097 = vld [vmem:[#allocation8 + $0x58] sm:$0xf]
        %v1098 = vld [vmem:[#allocation8 + $0x5c] sm:$0xf]
        %v1099 = vld [vmem:[#allocation8 + $0x60] sm:$0xf]
        %v1100 = vld [vmem:[#allocation8 + $0x64] sm:$0xf]
        %v1101 = vld [vmem:[#allocation8 + $0x68] sm:$0xf]
        %v1102 = vld [vmem:[#allocation8 + $0x6c] sm:$0xf]
        %v1103 = vld [vmem:[#allocation8 + $0x70] sm:$0xf]
        %v1104 = vld [vmem:[#allocation8 + $0x74] sm:$0xf]
        %v1105 = vld [vmem:[#allocation8 + $0x78] sm:$0xf]
        %v1106 = vld [vmem:[#allocation8 + $0x7c] sm:$0xf]
        %v1107 = vld [vmem:[#allocation8 + $0x80] sm:$0xf]
        %v1108 = vld [vmem:[#allocation8 + $0x84] sm:$0xf]
        %v1109 = vld [vmem:[#allocation8 + $0x88] sm:$0xf]
        %v1110 = vld [vmem:[#allocation8 + $0x8c] sm:$0xf]
        %v1111 = vld [vmem:[#allocation8 + $0x90] sm:$0xf]
        %v1112 = vld [vmem:[#allocation8 + $0x94] sm:$0xf]
        %v1113 = vld [vmem:[#allocation8 + $0x98] sm:$0xf]
        %v1114 = vld [vmem:[#allocation8 + $0x9c] sm:$0xf]
        %v1115 = vld [vmem:[#allocation8 + $0xa0] sm:$0xf]
        %v1116 = vld [vmem:[#allocation8 + $0xa4] sm:$0xf]
        %v1117 = vld [vmem:[#allocation8 + $0xa8] sm:$0xf]
        %v1118 = vld [vmem:[#allocation8 + $0xac] sm:$0xf]
        %v1119 = vld [vmem:[#allocation8 + $0xb0] sm:$0xf]
        %v1120 = vld [vmem:[#allocation8 + $0xb4] sm:$0xf]
        %v1121 = vld [vmem:[#allocation8 + $0xb8] sm:$0xf]
        %v1122 = vld [vmem:[#allocation8 + $0xbc] sm:$0xf]
        %v1123 = vld [vmem:[#allocation8 + $0xc0] sm:$0xf]
        %v1124 = vld [vmem:[#allocation8 + $0xc4] sm:$0xf]
        %v1125 = vld [vmem:[#allocation8 + $0xc8] sm:$0xf]
        %v1126 = vld [vmem:[#allocation8 + $0xcc] sm:$0xf]
        %v1127 = vld [vmem:[#allocation8 + $0xd0] sm:$0xf]
        %v1128 = vld [vmem:[#allocation8 + $0xd4] sm:$0xf]
        %v1129 = vld [vmem:[#allocation8 + $0xd8] sm:$0xf]
        %v1130 = vld [vmem:[#allocation8 + $0xdc] sm:$0xf]
        %v1131 = vld [vmem:[#allocation8 + $0xe0] sm:$0xf]
        %v1132 = vld [vmem:[#allocation8 + $0xe4] sm:$0xf]
        %v1133 = vld [vmem:[#allocation8 + $0xe8] sm:$0xf]
        %v1134 = vld [vmem:[#allocation8 + $0xec] sm:$0xf]
        %v1135 = vld [vmem:[#allocation8 + $0xf0] sm:$0xf]
        %v1136 = vld [vmem:[#allocation8 + $0xf4] sm:$0xf]
        %v1137 = vld [vmem:[#allocation8 + $0xf8] sm:$0xf]
        %v1138 = vld [vmem:[#allocation8 + $0xfc] sm:$0xf]
        %v1203 = vunpack.c.l.b16 %v1075
        %v1204 = vunpack.c.l.b16 %v1076
        %v1205 = vunpack.c.l.b16 %v1077
        %v1206 = vunpack.c.l.b16 %v1078
        %v1207 = vunpack.c.l.b16 %v1079
        %v1208 = vunpack.c.l.b16 %v1080
        %v1209 = vunpack.c.l.b16 %v1081
        %v1210 = vunpack.c.l.b16 %v1082
        %v1211 = vunpack.c.l.b16 %v1083
        %v1212 = vunpack.c.l.b16 %v1084
        %v1213 = vunpack.c.l.b16 %v1085
        %v1214 = vunpack.c.l.b16 %v1086
        %v1215 = vunpack.c.l.b16 %v1087
        %v1216 = vunpack.c.l.b16 %v1088
        %v1217 = vunpack.c.l.b16 %v1089
        %v1218 = vunpack.c.l.b16 %v1090
        %v1219 = vunpack.c.l.b16 %v1091
        %v1220 = vunpack.c.l.b16 %v1092
        %v1221 = vunpack.c.l.b16 %v1093
        %v1222 = vunpack.c.l.b16 %v1094
        %v1223 = vunpack.c.l.b16 %v1095
        %v1224 = vunpack.c.l.b16 %v1096
        %v1225 = vunpack.c.l.b16 %v1097
        %v1226 = vunpack.c.l.b16 %v1098
        %v1227 = vunpack.c.l.b16 %v1099
        %v1228 = vunpack.c.l.b16 %v1100
        %v1229 = vunpack.c.l.b16 %v1101
        %v1230 = vunpack.c.l.b16 %v1102
        %v1231 = vunpack.c.l.b16 %v1103
        %v1232 = vunpack.c.l.b16 %v1104
        %v1233 = vunpack.c.l.b16 %v1105
        %v1234 = vunpack.c.l.b16 %v1106
        %v1235 = vunpack.c.l.b16 %v1107
        %v1236 = vunpack.c.l.b16 %v1108
        %v1237 = vunpack.c.l.b16 %v1109
        %v1238 = vunpack.c.l.b16 %v1110
        %v1239 = vunpack.c.l.b16 %v1111
        %v1240 = vunpack.c.l.b16 %v1112
        %v1241 = vunpack.c.l.b16 %v1113
        %v1242 = vunpack.c.l.b16 %v1114
        %v1243 = vunpack.c.l.b16 %v1115
        %v1244 = vunpack.c.l.b16 %v1116
        %v1245 = vunpack.c.l.b16 %v1117
        %v1246 = vunpack.c.l.b16 %v1118
        %v1247 = vunpack.c.l.b16 %v1119
        %v1248 = vunpack.c.l.b16 %v1120
        %v1249 = vunpack.c.l.b16 %v1121
        %v1250 = vunpack.c.l.b16 %v1122
        %v1251 = vunpack.c.l.b16 %v1123
        %v1252 = vunpack.c.l.b16 %v1124
        %v1253 = vunpack.c.l.b16 %v1125
        %v1254 = vunpack.c.l.b16 %v1126
        %v1255 = vunpack.c.l.b16 %v1127
        %v1256 = vunpack.c.l.b16 %v1128
        %v1257 = vunpack.c.l.b16 %v1129
        %v1258 = vunpack.c.l.b16 %v1130
        %v1259 = vunpack.c.l.b16 %v1131
        %v1260 = vunpack.c.l.b16 %v1132
        %v1261 = vunpack.c.l.b16 %v1133
        %v1262 = vunpack.c.l.b16 %v1134
        %v1263 = vunpack.c.l.b16 %v1135
        %v1264 = vunpack.c.l.b16 %v1136
        %v1265 = vunpack.c.l.b16 %v1137
        %v1266 = vunpack.c.l.b16 %v1138
        %v1267 = vpack.c.b16 %v1204, %v1203
        %v1268 = vpack.c.b16 %v1206, %v1205
        %v1269 = vpack.c.b16 %v1208, %v1207
        %v1270 = vpack.c.b16 %v1210, %v1209
        %v1271 = vpack.c.b16 %v1212, %v1211
        %v1272 = vpack.c.b16 %v1214, %v1213
        %v1273 = vpack.c.b16 %v1216, %v1215
        %v1274 = vpack.c.b16 %v1218, %v1217
        %v1275 = vpack.c.b16 %v1220, %v1219
        %v1276 = vpack.c.b16 %v1222, %v1221
        %v1277 = vpack.c.b16 %v1224, %v1223
        %v1278 = vpack.c.b16 %v1226, %v1225
        %v1279 = vpack.c.b16 %v1228, %v1227
        %v1280 = vpack.c.b16 %v1230, %v1229
        %v1281 = vpack.c.b16 %v1232, %v1231
        %v1282 = vpack.c.b16 %v1234, %v1233
        %v1283 = vpack.c.b16 %v1236, %v1235
        %v1284 = vpack.c.b16 %v1238, %v1237
        %v1285 = vpack.c.b16 %v1240, %v1239
        %v1286 = vpack.c.b16 %v1242, %v1241
        %v1287 = vpack.c.b16 %v1244, %v1243
        %v1288 = vpack.c.b16 %v1246, %v1245
        %v1289 = vpack.c.b16 %v1248, %v1247
        %v1290 = vpack.c.b16 %v1250, %v1249
        %v1291 = vpack.c.b16 %v1252, %v1251
        %v1292 = vpack.c.b16 %v1254, %v1253
        %v1293 = vpack.c.b16 %v1256, %v1255
        %v1294 = vpack.c.b16 %v1258, %v1257
        %v1295 = vpack.c.b16 %v1260, %v1259
        %v1296 = vpack.c.b16 %v1262, %v1261
        %v1297 = vpack.c.b16 %v1264, %v1263
        %v1298 = vpack.c.b16 %v1266, %v1265
        %1331 = vmatpush.bf16.msra.mxu0 %v1274
        %1332 = vmatpush.bf16.msra.mxu0 %v1273
        %1333 = vmatpush.bf16.msra.mxu0 %v1272
        %1334 = vmatpush.bf16.msra.mxu0 %v1271
        %1335 = vmatpush.bf16.msra.mxu0 %v1270
        %1336 = vmatpush.bf16.msra.mxu0 %v1269
        %1337 = vmatpush.bf16.msra.mxu0 %v1268
        %1338 = vmatpush.bf16.msra.mxu0 %v1267
        %1339 = vmatmul.bf16.gmra.mxu0 %v1023
        %v1340 = vpop.f32.mrf.mxu0
        %v1341 = vadd.f32 0.0, %v1340
        %v1342 = vpop.f32.mrf.mxu0
        %v1343 = vadd.f32 0.0, %v1342
        %1344 = vmatmul.bf16.gmra.mxu0 %v1027
        %v1345 = vpop.f32.mrf.mxu0
        %v1346 = vadd.f32 0.0, %v1345
        %v1347 = vpop.f32.mrf.mxu0
        %v1348 = vadd.f32 0.0, %v1347
        %1349 = vmatmul.bf16.gmra.mxu0 %v1031
        %v1350 = vpop.f32.mrf.mxu0
        %v1351 = vadd.f32 0.0, %v1350
        %v1352 = vpop.f32.mrf.mxu0
        %v1353 = vadd.f32 0.0, %v1352
        %1354 = vmatmul.bf16.gmra.mxu0 %v1035
        %v1355 = vpop.f32.mrf.mxu0
        %v1356 = vadd.f32 0.0, %v1355
        %v1357 = vpop.f32.mrf.mxu0
        %v1358 = vadd.f32 0.0, %v1357
        %1359 = vmatmul.bf16.gmra.mxu0 %v1039
        %v1360 = vpop.f32.mrf.mxu0
        %v1361 = vadd.f32 0.0, %v1360
        %v1362 = vpop.f32.mrf.mxu0
        %v1363 = vadd.f32 0.0, %v1362
        %1364 = vmatmul.bf16.gmra.mxu0 %v1043
        %v1365 = vpop.f32.mrf.mxu0
        %v1366 = vadd.f32 0.0, %v1365
        %v1367 = vpop.f32.mrf.mxu0
        %v1368 = vadd.f32 0.0, %v1367
        %1369 = vmatmul.bf16.gmra.mxu0 %v1047
        %v1370 = vpop.f32.mrf.mxu0
        %v1371 = vadd.f32 0.0, %v1370
        %v1372 = vpop.f32.mrf.mxu0
        %v1373 = vadd.f32 0.0, %v1372
        %1374 = vmatmul.bf16.gmra.mxu0 %v1051
        %v1375 = vpop.f32.mrf.mxu0
        %v1376 = vadd.f32 0.0, %v1375
        %v1377 = vpop.f32.mrf.mxu0
        %v1378 = vadd.f32 0.0, %v1377
        %1379 = vmatmul.bf16.gmra.mxu0 %v1055
        %v1380 = vpop.f32.mrf.mxu0
        %v1381 = vadd.f32 0.0, %v1380
        %v1382 = vpop.f32.mrf.mxu0
        %v1383 = vadd.f32 0.0, %v1382
        %1384 = vmatmul.bf16.gmra.mxu0 %v1059
        %v1385 = vpop.f32.mrf.mxu0
        %v1386 = vadd.f32 0.0, %v1385
        %v1387 = vpop.f32.mrf.mxu0
        %v1388 = vadd.f32 0.0, %v1387
        %1389 = vmatmul.bf16.gmra.mxu0 %v1063
        %v1390 = vpop.f32.mrf.mxu0
        %v1391 = vadd.f32 0.0, %v1390
        %v1392 = vpop.f32.mrf.mxu0
        %v1393 = vadd.f32 0.0, %v1392
        %1394 = vmatmul.bf16.gmra.mxu0 %v1067
        %v1395 = vpop.f32.mrf.mxu0
        %v1396 = vadd.f32 0.0, %v1395
        %v1397 = vpop.f32.mrf.mxu0
        %v1398 = vadd.f32 0.0, %v1397
        %1399 = vmatmul.bf16.gmra.mxu0 %v1071
        %v1400 = vpop.f32.mrf.mxu0
        %v1401 = vadd.f32 0.0, %v1400
        %v1402 = vpop.f32.mrf.mxu0
        %1403 = vdwg.mxu0
        %1404 = vmatpush.bf16.msra.mxu0 %v1282
        %1405 = vmatpush.bf16.msra.mxu0 %v1281
        %1406 = vmatpush.bf16.msra.mxu0 %v1280
        %1407 = vmatpush.bf16.msra.mxu0 %v1279
        %1408 = vmatpush.bf16.msra.mxu0 %v1278
        %1409 = vmatpush.bf16.msra.mxu0 %v1277
        %1410 = vmatpush.bf16.msra.mxu0 %v1276
        %1411 = vmatpush.bf16.msra.mxu0 %v1275
        %1412 = vmatmul.bf16.gmra.mxu0 %v1024
        %v1413 = vpop.f32.mrf.mxu0
        %v1414 = vadd.f32 %v1341, %v1413
        %v1415 = vpop.f32.mrf.mxu0
        %v1416 = vadd.f32 %v1343, %v1415
        %1417 = vmatmul.bf16.gmra.mxu0 %v1028
        %v1418 = vpop.f32.mrf.mxu0
        %v1419 = vadd.f32 %v1346, %v1418
        %v1420 = vpop.f32.mrf.mxu0
        %v1421 = vadd.f32 %v1348, %v1420
        %1422 = vmatmul.bf16.gmra.mxu0 %v1032
        %v1423 = vpop.f32.mrf.mxu0
        %v1424 = vadd.f32 %v1351, %v1423
        %v1425 = vpop.f32.mrf.mxu0
        %v1426 = vadd.f32 %v1353, %v1425
        %1427 = vmatmul.bf16.gmra.mxu0 %v1036
        %v1428 = vpop.f32.mrf.mxu0
        %v1429 = vadd.f32 %v1356, %v1428
        %v1430 = vpop.f32.mrf.mxu0
        %v1431 = vadd.f32 %v1358, %v1430
        %1432 = vmatmul.bf16.gmra.mxu0 %v1040
        %v1433 = vpop.f32.mrf.mxu0
        %v1434 = vadd.f32 %v1361, %v1433
        %v1435 = vpop.f32.mrf.mxu0
        %v1436 = vadd.f32 %v1363, %v1435
        %1437 = vmatmul.bf16.gmra.mxu0 %v1044
        %v1438 = vpop.f32.mrf.mxu0
        %v1439 = vadd.f32 %v1366, %v1438
        %v1440 = vpop.f32.mrf.mxu0
        %v1441 = vadd.f32 %v1368, %v1440
        %1442 = vmatmul.bf16.gmra.mxu0 %v1048
        %v1443 = vpop.f32.mrf.mxu0
        %v1444 = vadd.f32 %v1371, %v1443
        %v1445 = vpop.f32.mrf.mxu0
        %v1446 = vadd.f32 %v1373, %v1445
        %1447 = vmatmul.bf16.gmra.mxu0 %v1052
        %v1448 = vpop.f32.mrf.mxu0
        %v1449 = vadd.f32 %v1376, %v1448
        %v1450 = vpop.f32.mrf.mxu0
        %v1451 = vadd.f32 %v1378, %v1450
        %1452 = vmatmul.bf16.gmra.mxu0 %v1056
        %v1453 = vpop.f32.mrf.mxu0
        %v1454 = vadd.f32 %v1381, %v1453
        %v1455 = vpop.f32.mrf.mxu0
        %v1456 = vadd.f32 %v1383, %v1455
        %1457 = vmatmul.bf16.gmra.mxu0 %v1060
        %v1458 = vpop.f32.mrf.mxu0
        %v1459 = vadd.f32 %v1386, %v1458
        %v1460 = vpop.f32.mrf.mxu0
        %v1461 = vadd.f32 %v1388, %v1460
        %1462 = vmatmul.bf16.gmra.mxu0 %v1064
        %v1463 = vpop.f32.mrf.mxu0
        %v1464 = vadd.f32 %v1391, %v1463
        %v1465 = vpop.f32.mrf.mxu0
        %v1466 = vadd.f32 %v1393, %v1465
        %1467 = vmatmul.bf16.gmra.mxu0 %v1068
        %v1468 = vpop.f32.mrf.mxu0
        %v1469 = vadd.f32 %v1396, %v1468
        %v1470 = vpop.f32.mrf.mxu0
        %v1471 = vadd.f32 %v1398, %v1470
        %1472 = vmatmul.bf16.gmra.mxu0 %v1072
        %v1473 = vpop.f32.mrf.mxu0
        %v1474 = vadd.f32 %v1401, %v1473
        %v1475 = vpop.f32.mrf.mxu0
        %1476 = vdwg.mxu0
        %1477 = vmatpush.bf16.msra.mxu0 %v1290
        %1478 = vmatpush.bf16.msra.mxu0 %v1289
        %1479 = vmatpush.bf16.msra.mxu0 %v1288
        %1480 = vmatpush.bf16.msra.mxu0 %v1287
        %1481 = vmatpush.bf16.msra.mxu0 %v1286
        %1482 = vmatpush.bf16.msra.mxu0 %v1285
        %1483 = vmatpush.bf16.msra.mxu0 %v1284
        %1484 = vmatpush.bf16.msra.mxu0 %v1283
        %1485 = vmatmul.bf16.gmra.mxu0 %v1025
        %v1486 = vpop.f32.mrf.mxu0
        %v1487 = vadd.f32 %v1414, %v1486
        %v1488 = vpop.f32.mrf.mxu0
        %v1489 = vadd.f32 %v1416, %v1488
        %1490 = vmatmul.bf16.gmra.mxu0 %v1029
        %v1491 = vpop.f32.mrf.mxu0
        %v1492 = vadd.f32 %v1419, %v1491
        %v1493 = vpop.f32.mrf.mxu0
        %v1494 = vadd.f32 %v1421, %v1493
        %1495 = vmatmul.bf16.gmra.mxu0 %v1033
        %v1496 = vpop.f32.mrf.mxu0
        %v1497 = vadd.f32 %v1424, %v1496
        %v1498 = vpop.f32.mrf.mxu0
        %v1499 = vadd.f32 %v1426, %v1498
        %1500 = vmatmul.bf16.gmra.mxu0 %v1037
        %v1501 = vpop.f32.mrf.mxu0
        %v1502 = vadd.f32 %v1429, %v1501
        %v1503 = vpop.f32.mrf.mxu0
        %v1504 = vadd.f32 %v1431, %v1503
        %1505 = vmatmul.bf16.gmra.mxu0 %v1041
        %v1506 = vpop.f32.mrf.mxu0
        %v1507 = vadd.f32 %v1434, %v1506
        %v1508 = vpop.f32.mrf.mxu0
        %v1509 = vadd.f32 %v1436, %v1508
        %1510 = vmatmul.bf16.gmra.mxu0 %v1045
        %v1511 = vpop.f32.mrf.mxu0
        %v1512 = vadd.f32 %v1439, %v1511
        %v1513 = vpop.f32.mrf.mxu0
        %v1514 = vadd.f32 %v1441, %v1513
        %1515 = vmatmul.bf16.gmra.mxu0 %v1049
        %v1516 = vpop.f32.mrf.mxu0
        %v1517 = vadd.f32 %v1444, %v1516
        %v1518 = vpop.f32.mrf.mxu0
        %v1519 = vadd.f32 %v1446, %v1518
        %1520 = vmatmul.bf16.gmra.mxu0 %v1053
        %v1521 = vpop.f32.mrf.mxu0
        %v1522 = vadd.f32 %v1449, %v1521
        %v1523 = vpop.f32.mrf.mxu0
        %v1524 = vadd.f32 %v1451, %v1523
        %1525 = vmatmul.bf16.gmra.mxu0 %v1057
        %v1526 = vpop.f32.mrf.mxu0
        %v1527 = vadd.f32 %v1454, %v1526
        %v1528 = vpop.f32.mrf.mxu0
        %v1529 = vadd.f32 %v1456, %v1528
        %1530 = vmatmul.bf16.gmra.mxu0 %v1061
        %v1531 = vpop.f32.mrf.mxu0
        %v1532 = vadd.f32 %v1459, %v1531
        %v1533 = vpop.f32.mrf.mxu0
        %v1534 = vadd.f32 %v1461, %v1533
        %1535 = vmatmul.bf16.gmra.mxu0 %v1065
        %v1536 = vpop.f32.mrf.mxu0
        %v1537 = vadd.f32 %v1464, %v1536
        %v1538 = vpop.f32.mrf.mxu0
        %v1539 = vadd.f32 %v1466, %v1538
        %1540 = vmatmul.bf16.gmra.mxu0 %v1069
        %v1541 = vpop.f32.mrf.mxu0
        %v1542 = vadd.f32 %v1469, %v1541
        %v1543 = vpop.f32.mrf.mxu0
        %v1544 = vadd.f32 %v1471, %v1543
        %1545 = vmatmul.bf16.gmra.mxu0 %v1073
        %v1546 = vpop.f32.mrf.mxu0
        %v1547 = vadd.f32 %v1474, %v1546
        %v1548 = vpop.f32.mrf.mxu0
        %1549 = vdwg.mxu0
        %1550 = vmatpush.bf16.msra.mxu0 %v1298
        %1551 = vmatpush.bf16.msra.mxu0 %v1297
        %1552 = vmatpush.bf16.msra.mxu0 %v1296
        %1553 = vmatpush.bf16.msra.mxu0 %v1295
        %1554 = vmatpush.bf16.msra.mxu0 %v1294
        %1555 = vmatpush.bf16.msra.mxu0 %v1293
        %1556 = vmatpush.bf16.msra.mxu0 %v1292
        %1557 = vmatpush.bf16.msra.mxu0 %v1291
        %1558 = vmatmul.bf16.gmra.mxu0 %v1026
        %v1559 = vpop.f32.mrf.mxu0
        %v1560 = vadd.f32 %v1487, %v1559
        %v1561 = vpop.f32.mrf.mxu0
        %v1562 = vadd.f32 %v1489, %v1561
        %1563 = vmatmul.bf16.gmra.mxu0 %v1030
        %v1564 = vpop.f32.mrf.mxu0
        %v1565 = vadd.f32 %v1492, %v1564
        %v1566 = vpop.f32.mrf.mxu0
        %v1567 = vadd.f32 %v1494, %v1566
        %1568 = vmatmul.bf16.gmra.mxu0 %v1034
        %v1569 = vpop.f32.mrf.mxu0
        %v1570 = vadd.f32 %v1497, %v1569
        %v1571 = vpop.f32.mrf.mxu0
        %v1572 = vadd.f32 %v1499, %v1571
        %1573 = vmatmul.bf16.gmra.mxu0 %v1038
        %v1574 = vpop.f32.mrf.mxu0
        %v1575 = vadd.f32 %v1502, %v1574
        %v1576 = vpop.f32.mrf.mxu0
        %v1577 = vadd.f32 %v1504, %v1576
        %1578 = vmatmul.bf16.gmra.mxu0 %v1042
        %v1579 = vpop.f32.mrf.mxu0
        %v1580 = vadd.f32 %v1507, %v1579
        %v1581 = vpop.f32.mrf.mxu0
        %v1582 = vadd.f32 %v1509, %v1581
        %1583 = vmatmul.bf16.gmra.mxu0 %v1046
        %v1584 = vpop.f32.mrf.mxu0
        %v1585 = vadd.f32 %v1512, %v1584
        %v1586 = vpop.f32.mrf.mxu0
        %v1587 = vadd.f32 %v1514, %v1586
        %1588 = vmatmul.bf16.gmra.mxu0 %v1050
        %v1589 = vpop.f32.mrf.mxu0
        %v1590 = vadd.f32 %v1517, %v1589
        %v1591 = vpop.f32.mrf.mxu0
        %v1592 = vadd.f32 %v1519, %v1591
        %1593 = vmatmul.bf16.gmra.mxu0 %v1054
        %v1594 = vpop.f32.mrf.mxu0
        %v1595 = vadd.f32 %v1522, %v1594
        %v1596 = vpop.f32.mrf.mxu0
        %v1597 = vadd.f32 %v1524, %v1596
        %1598 = vmatmul.bf16.gmra.mxu0 %v1058
        %v1599 = vpop.f32.mrf.mxu0
        %v1600 = vadd.f32 %v1527, %v1599
        %v1601 = vpop.f32.mrf.mxu0
        %v1602 = vadd.f32 %v1529, %v1601
        %1603 = vmatmul.bf16.gmra.mxu0 %v1062
        %v1604 = vpop.f32.mrf.mxu0
        %v1605 = vadd.f32 %v1532, %v1604
        %v1606 = vpop.f32.mrf.mxu0
        %v1607 = vadd.f32 %v1534, %v1606
        %1608 = vmatmul.bf16.gmra.mxu0 %v1066
        %v1609 = vpop.f32.mrf.mxu0
        %v1610 = vadd.f32 %v1537, %v1609
        %v1611 = vpop.f32.mrf.mxu0
        %v1612 = vadd.f32 %v1539, %v1611
        %1613 = vmatmul.bf16.gmra.mxu0 %v1070
        %v1614 = vpop.f32.mrf.mxu0
        %v1615 = vadd.f32 %v1542, %v1614
        %v1616 = vpop.f32.mrf.mxu0
        %v1617 = vadd.f32 %v1544, %v1616
        %1618 = vmatmul.bf16.gmra.mxu0 %v1074
        %v1619 = vpop.f32.mrf.mxu0
        %v1620 = vadd.f32 %v1547, %v1619
        %v1621 = vpop.f32.mrf.mxu0
        %1622 = vdwg.mxu0
        %v1623 = vadd.f32 %v998, %v1560
        %v1624 = vadd.f32 %v999, %v1562
        %v1625 = vadd.f32 %v1000, %v1565
        %v1626 = vadd.f32 %v1001, %v1567
        %v1627 = vadd.f32 %v1002, %v1570
        %v1628 = vadd.f32 %v1003, %v1572
        %v1629 = vadd.f32 %v1004, %v1575
        %v1630 = vadd.f32 %v1005, %v1577
        %v1631 = vadd.f32 %v1006, %v1580
        %v1632 = vadd.f32 %v1007, %v1582
        %v1633 = vadd.f32 %v1008, %v1585
        %v1634 = vadd.f32 %v1009, %v1587
        %v1635 = vadd.f32 %v1010, %v1590
        %v1636 = vadd.f32 %v1011, %v1592
        %v1637 = vadd.f32 %v1012, %v1595
        %v1638 = vadd.f32 %v1013, %v1597
        %v1639 = vadd.f32 %v1014, %v1600
        %v1640 = vadd.f32 %v1015, %v1602
        %v1641 = vadd.f32 %v1016, %v1605
        %v1642 = vadd.f32 %v1017, %v1607
        %v1643 = vadd.f32 %v1018, %v1610
        %v1644 = vadd.f32 %v1019, %v1612
        %v1645 = vadd.f32 %v1020, %v1615
        %v1646 = vadd.f32 %v1021, %v1617
        %v1647 = vadd.f32 %v1022, %v1620
        %1648 = vst [vmem:[%s327] sm:$0xff] %v1623
        %1649 = vst [vmem:[%s327 + $0x8] sm:$0xff] %v1624
        %1650 = vst [vmem:[%s327 + $0x10] sm:$0xff] %v1625
        %1651 = vst [vmem:[%s327 + $0x18] sm:$0xff] %v1626
        %1652 = vst [vmem:[%s327 + $0x20] sm:$0xff] %v1627
        %1653 = vst [vmem:[%s327 + $0x28] sm:$0xff] %v1628
        %1654 = vst [vmem:[%s327 + $0x30] sm:$0xff] %v1629
        %1655 = vst [vmem:[%s327 + $0x38] sm:$0xff] %v1630
        %1656 = vst [vmem:[%s327 + $0x40] sm:$0xff] %v1631
        %1657 = vst [vmem:[%s327 + $0x48] sm:$0xff] %v1632
        %1658 = vst [vmem:[%s327 + $0x50] sm:$0xff] %v1633
        %1659 = vst [vmem:[%s327 + $0x58] sm:$0xff] %v1634
        %1660 = vst [vmem:[%s327 + $0x60] sm:$0xff] %v1635
        %1661 = vst [vmem:[%s327 + $0x68] sm:$0xff] %v1636
        %1662 = vst [vmem:[%s327 + $0x70] sm:$0xff] %v1637
        %1663 = vst [vmem:[%s327 + $0x78] sm:$0xff] %v1638
        %1664 = vst [vmem:[%s327 + $0x80] sm:$0xff] %v1639
        %1665 = vst [vmem:[%s327 + $0x88] sm:$0xff] %v1640
        %1666 = vst [vmem:[%s327 + $0x90] sm:$0xff] %v1641
        %1667 = vst [vmem:[%s327 + $0x98] sm:$0xff] %v1642
        %1668 = vst [vmem:[%s327 + $0xa0] sm:$0xff] %v1643
        %1669 = vst [vmem:[%s327 + $0xa8] sm:$0xff] %v1644
        %1670 = vst [vmem:[%s327 + $0xb0] sm:$0xff] %v1645
        %1671 = vst [vmem:[%s327 + $0xb8] sm:$0xff] %v1646
        %1672 = vst [vmem:[%s327 + $0xc0] sm:$0xff] %v1647
        %s1673 = sand.u32 %s169, 1
        %s1674 = scalar_lea.sflag [#allocation4], %s1673
        %s1675 = sand.u32 %s169, 1
        %s1676 = smul.addr %s1675, 200
        %s1677 = scalar_lea.vmem [#allocation10], %s1676
        // Predicated region
        $region61: #{tpu_custom_call.1} parent=39 // pred_check
          %p1678 = pneg %p179
        $region62: #{tpu_custom_call.1} parent=39 // pred_check_branch
          %1680 = sbr.rel (%p1678) target = $region64
        $region63: #{tpu_custom_call.1} parent=39 // pred_region
          %s1681 = smul.u32 25, %s28
          %1683 = vsyncadd %s1674, 0
          %s1684 = smul.addr %s1681, 8
          %s1685 = scalar_lea.hbm %s5, %s1684
          %s1686 = sshll.u32 %s1677, 4
          %s1687 = int_to_ptr.vmem [resolvable:$true] %s1686
          %s1688 = sshll.u32 %s1685, 4
          %s1689 = int_to_ptr.hbm [resolvable:$true] %s1688
          %1694 = dma.vmem_to_hbm [thread:$0]  %s1687, 3200, %s1689, %s1674, 128, 128, 8
        $region64: #{tpu_custom_call.1} parent=39 // pred_fallthru
          _
      $region40: #{tpu_custom_call.1} parent=5 // pred_fallthru
        _
      %p1695 = scmp.le.s32.totalorder 2, %s19
      // Predicated region
      $region65: #{tpu_custom_call.1} parent=5 // pred_check
        %p1696 = pneg %p1695
      $region66: #{tpu_custom_call.1} parent=5 // pred_check_branch
        %1698 = sbr.rel (%p1696) target = $region68
      $region67: #{tpu_custom_call.1} parent=5 // pred_region
        %s1699 = ssub.s32 %s19, 2
        // Predicated region
        $region69: #{tpu_custom_call.1} parent=67 // pred_check
          %p1700 = pneg %p185
        $region70: #{tpu_custom_call.1} parent=67 // pred_check_branch
          %1702 = sbr.rel (%p1700) target = $region72
        $region71: #{tpu_custom_call.1} parent=67 // pred_region
          %s1703 = sand.u32 %s170, 1
          %s1704 = scalar_lea.sflag [#allocation4], %s1703
          %s1705 = sand.u32 %s170, 1
          %s1706 = smul.addr %s1705, 200
          %s1707 = scalar_lea.vmem [#allocation10], %s1706
          %1709 = dma.done %s1704, 3200
        $region72: #{tpu_custom_call.1} parent=67 // pred_fallthru
          _
      $region68: #{tpu_custom_call.1} parent=5 // pred_fallthru
        _
    $region6: #{tpu_custom_call.1} parent=1 // loop_footer
      %s23 = sadd.s32 1, %s19
    $region7: #{tpu_custom_call.1} parent=1 // loop_footer_branch
      %18 = sbr.rel target = $region3
    $region8: #{tpu_custom_call.1} parent=1 // loop_exit
      _
    %1710 = vsyncpa [#allocation3], 1
    %s1711 = scalar_lea.sflag [#allocation3], 1
    %1712 = vsyncpa %s1711, 1
    %1713 = vsyncpa [#allocation6], 1
    %1714 = vsyncpa [#allocation9], 1
    %1715 = vsyncpa [#allocation4], 1
    %s1716 = scalar_lea.sflag [#allocation4], 1
    %1717 = vsyncpa %s1716, 1

</llo_original>
